<compile_context>
chip_gen: v5e
topology: v5e:2x2
jax: 0.10.0
libtpu: 0.0.40
codegen_flags: <defaults>
</compile_context>

<pallas_src>
import functools
import math

import jax
import jax.numpy as jnp
from jax.experimental import pallas as pl
from jax.experimental.pallas import tpu as pltpu


# ----------------------------- fused block kernel ---------------------------

def _decoder_block_kernel(
    dec_ref, enc_ref, tbias_ref, sbias_ref,
    wqkv1_ref, bqkv1_ref, wo1_ref, bo1_ref, ln1g_ref, ln1b_ref,
    wq2_ref, bq2_ref, wkv2_ref, bkv2_ref, wo2_ref, bo2_ref, ln2g_ref, ln2b_ref,
    w1_ref, b1_ref, w2_ref, b2_ref, ln3g_ref, ln3b_ref,
    out_ref, *, n_heads, eps):
    # One full DecoderBlock for a single batch element, entirely in VMEM.
    x = dec_ref[...]            # (S, D)
    enc = enc_ref[...]          # (Se, D)
    S, D = x.shape
    Dh = D // n_heads
    scale = 1.0 / math.sqrt(Dh)

    def layer_norm(y, g, b):
        mu = jnp.mean(y, axis=-1, keepdims=True)
        var = jnp.mean((y - mu) ** 2, axis=-1, keepdims=True)
        return (y - mu) * jax.lax.rsqrt(var + eps) * g + b

    def attend(q, k, v, bias):
        # q: (S, D), k/v: (Sk, D), bias: (S, Sk) additive (0 / -1e9).
        outs = []
        for h in range(n_heads):              # unrolled; heads live in lanes
            lo, hi = h * Dh, (h + 1) * Dh
            qh, kh, vh = q[:, lo:hi], k[:, lo:hi], v[:, lo:hi]
            # qh @ kh.T without an explicit transpose (contract last dims).
            s = jax.lax.dot_general(
                qh, kh, (((1,), (1,)), ((), ())),
                preferred_element_type=jnp.float32) * scale + bias
            s = s - jnp.max(s, axis=-1, keepdims=True)
            p = jnp.exp(s)
            p = p * pl.reciprocal(jnp.sum(p, axis=-1, keepdims=True),
                                  approx=True)
            outs.append(jnp.dot(p, vh, preferred_element_type=jnp.float32))
        return jnp.concatenate(outs, axis=-1)   # (S, D)

    # --- self-attention (fused QKV) + residual + LN -------------------------
    qkv = jnp.dot(x, wqkv1_ref[...],
                  preferred_element_type=jnp.float32) + bqkv1_ref[...]
    a1 = attend(qkv[:, :D], qkv[:, D:2 * D], qkv[:, 2 * D:], tbias_ref[...])
    a1 = jnp.dot(a1, wo1_ref[...],
                 preferred_element_type=jnp.float32) + bo1_ref[...]
    x = layer_norm(x + a1, ln1g_ref[...], ln1b_ref[...])

    # --- cross-attention (Q from x, fused KV from enc) + residual + LN ------
    q2 = jnp.dot(x, wq2_ref[...],
                 preferred_element_type=jnp.float32) + bq2_ref[...]
    kv2 = jnp.dot(enc, wkv2_ref[...],
                  preferred_element_type=jnp.float32) + bkv2_ref[...]
    a2 = attend(q2, kv2[:, :D], kv2[:, D:], sbias_ref[...])
    a2 = jnp.dot(a2, wo2_ref[...],
                 preferred_element_type=jnp.float32) + bo2_ref[...]
    x = layer_norm(x + a2, ln2g_ref[...], ln2b_ref[...])

    # --- FFN (hidden activation never leaves VMEM) + residual + LN ----------
    hdn = jnp.maximum(
        jnp.dot(x, w1_ref[...], preferred_element_type=jnp.float32)
        + b1_ref[...], 0.0)
    f = jnp.dot(hdn, w2_ref[...],
                preferred_element_type=jnp.float32) + b2_ref[...]
    out_ref[...] = layer_norm(x + f, ln3g_ref[...], ln3b_ref[...])


# ----------------------------- kernel wrapper --------------------------------

def pallas_decoder_block(p, enc, dec, src_bias, tar_bias, n_heads, eps=1e-5):
    B, S, D = dec.shape
    Se = enc.shape[1]
    F = p["ffn_w1"].shape[1]
    kern = functools.partial(_decoder_block_kernel, n_heads=n_heads, eps=eps)

    def bseq(s1, s2):        # per-batch sequence slab; leading dim squeezed
        return pl.BlockSpec((None, s1, s2), lambda b: (b, 0, 0))

    def bfull(r, c):         # full weight array, resident across grid steps
        return pl.BlockSpec((r, c), lambda b: (0, 0))

    return pl.pallas_call(
        kern,
        out_shape=jax.ShapeDtypeStruct((B, S, D), jnp.float32),
        grid=(B,),
        in_specs=[
            bseq(S, D),                 # dec
            bseq(Se, D),                # enc
            bseq(S, S),                 # tar additive bias
            bseq(S, Se),                # src additive bias
            bfull(D, 3 * D), bfull(1, 3 * D),     # wqkv1, bqkv1
            bfull(D, D), bfull(1, D),             # wo1, bo1
            bfull(1, D), bfull(1, D),             # ln1 gamma, beta
            bfull(D, D), bfull(1, D),             # wq2, bq2
            bfull(D, 2 * D), bfull(1, 2 * D),     # wkv2, bkv2
            bfull(D, D), bfull(1, D),             # wo2, bo2
            bfull(1, D), bfull(1, D),             # ln2 gamma, beta
            bfull(D, F), bfull(1, F),             # ffn_w1, ffn_b1
            bfull(F, D), bfull(1, D),             # ffn_w2, ffn_b2
            bfull(1, D), bfull(1, D),             # ln3 gamma, beta
        ],
        out_specs=bseq(S, D),
        compiler_params=pltpu.CompilerParams(
            dimension_semantics=("parallel",)),
    )(dec, enc, tar_bias, src_bias,
      p["wqkv1"], p["bqkv1"], p["wo1"], p["bo1"], p["ln1_g"], p["ln1_b"],
      p["wq2"], p["bq2"], p["wkv2"], p["bkv2"], p["wo2"], p["bo2"],
      p["ln2_g"], p["ln2_b"],
      p["ffn_w1"], p["ffn_b1"], p["ffn_w2"], p["ffn_b2"],
      p["ln3_g"], p["ln3_b"])


# ----------------------------- model (JAX glue) ------------------------------

def _mask_to_bias(mask, B, Sq, Sk):
    # 0/1 keep-mask -> additive bias (0 keep, -1e9 masked), computed once.
    if mask is None:
        return jnp.zeros((B, Sq, Sk), jnp.float32)
    m = jnp.asarray(mask)
    if m.ndim == 4:                 # (B, 1, Sq, Sk) -> (B, Sq, Sk)
        m = m.reshape(B, Sq, Sk)
    return jnp.where(m > 0, 0.0, -1e9).astype(jnp.float32)


def decoder_forward(params, tokens, enc, src_mask, tar_mask, n_heads):
    B, S = tokens.shape
    Se = enc.shape[1]
    # TODO(synk): embedding gather + positional-encoding add kept in plain JAX
    # (index gather has no clean small-scale Pallas equivalent).
    x = jnp.take(params["tok_emb"], tokens, axis=0)        # (B, S, D)
    x = x + params["pos_enc"][:S][None, :, :]
    tar_bias = _mask_to_bias(tar_mask, B, S, S)
    src_bias = _mask_to_bias(src_mask, B, S, Se)
    for blk in params["blocks"]:
        x = pallas_decoder_block(blk, enc, x, src_bias, tar_bias, n_heads)
    return x


# ----------------------------- parameter init ------------------------------

def init_params(key, n_blocks, d_model, n_heads, ffn_hidden, vocab, max_len):
    def nrm(k, shape, scale=0.02):
        return (scale * jax.random.normal(k, shape)).astype(jnp.float32)

    def zeros(*shape):
        return jnp.zeros(shape, jnp.float32)

    def ones(*shape):
        return jnp.ones(shape, jnp.float32)

    keys = jax.random.split(key, 1 + n_blocks)
    tok_emb = nrm(keys[0], (vocab, d_model))

    pos = jnp.arange(max_len, dtype=jnp.float32)[:, None]
    idx = jnp.arange(0, d_model, 2, dtype=jnp.float32)[None, :]
    angle = pos / jnp.power(10000.0, idx / d_model)
    pe = jnp.zeros((max_len, d_model), jnp.float32)
    pe = pe.at[:, 0::2].set(jnp.sin(angle))
    pe = pe.at[:, 1::2].set(jnp.cos(angle))

    blocks = []
    for bi in range(n_blocks):
        ks = jax.random.split(keys[1 + bi], 7)
        blocks.append({
            # self-attention: fused Q/K/V projection (D, 3D)
            "wqkv1": nrm(ks[0], (d_model, 3 * d_model)),
            "bqkv1": zeros(1, 3 * d_model),
            "wo1": nrm(ks[1], (d_model, d_model)), "bo1": zeros(1, d_model),
            "ln1_g": ones(1, d_model), "ln1_b": zeros(1, d_model),
            # cross-attention: Q from x, fused K/V (D, 2D) from enc
            "wq2": nrm(ks[2], (d_model, d_model)), "bq2": zeros(1, d_model),
            "wkv2": nrm(ks[3], (d_model, 2 * d_model)),
            "bkv2": zeros(1, 2 * d_model),
            "wo2": nrm(ks[4], (d_model, d_model)), "bo2": zeros(1, d_model),
            "ln2_g": ones(1, d_model), "ln2_b": zeros(1, d_model),
            # FFN
            "ffn_w1": nrm(ks[5], (d_model, ffn_hidden)),
            "ffn_b1": zeros(1, ffn_hidden),
            "ffn_w2": nrm(ks[6], (ffn_hidden, d_model)),
            "ffn_b2": zeros(1, d_model),
            "ln3_g": ones(1, d_model), "ln3_b": zeros(1, d_model),
        })

    return {"tok_emb": tok_emb, "pos_enc": pe, "blocks": blocks}


# ----------------------------- main ------------------------------

if __name__ == "__main__":
    n_blocks, d_model, n_heads, ffn_hidden = 2, 32, 4, 64
    vocab, max_len = 50, 16
    B, S = 2, 8

    key = jax.random.PRNGKey(0)
    k_par, k_tok, k_enc = jax.random.split(key, 3)

    params = init_params(k_par, n_blocks, d_model, n_heads, ffn_hidden,
                         vocab, max_len)

    tokens = jax.random.randint(k_tok, (B, S), 0, vocab, dtype=jnp.int32)
    enc = jax.random.normal(k_enc, (B, S, d_model), dtype=jnp.float32)

    # masks: causal target mask, all-ones source mask (1 = keep, 0 = masked)
    tar_mask = jnp.broadcast_to(
        jnp.tril(jnp.ones((S, S), jnp.float32))[None, None], (B, 1, S, S))
    src_mask = jnp.ones((B, 1, S, S), jnp.float32)

    out = decoder_forward(params, tokens, enc, src_mask, tar_mask, n_heads)
    out = jax.block_until_ready(out)
    assert out.shape == (B, S, d_model) and out.dtype == jnp.float32
    print("KERNEL_OK")
</pallas_src>

<mosaic_0001>
module attributes {stable_mosaic.version = 11 : i64} {
  func.func @_decoder_block_kernel(%arg0: i32, %arg1: memref<1x8x32xf32, #tpu.memory_space<vmem>>, %arg2: memref<1x8x32xf32, #tpu.memory_space<vmem>>, %arg3: memref<1x8x8xf32, #tpu.memory_space<vmem>>, %arg4: memref<1x8x8xf32, #tpu.memory_space<vmem>>, %arg5: memref<32x96xf32, #tpu.memory_space<vmem>>, %arg6: memref<1x96xf32, #tpu.memory_space<vmem>>, %arg7: memref<32x32xf32, #tpu.memory_space<vmem>>, %arg8: memref<1x32xf32, #tpu.memory_space<vmem>>, %arg9: memref<1x32xf32, #tpu.memory_space<vmem>>, %arg10: memref<1x32xf32, #tpu.memory_space<vmem>>, %arg11: memref<32x32xf32, #tpu.memory_space<vmem>>, %arg12: memref<1x32xf32, #tpu.memory_space<vmem>>, %arg13: memref<32x64xf32, #tpu.memory_space<vmem>>, %arg14: memref<1x64xf32, #tpu.memory_space<vmem>>, %arg15: memref<32x32xf32, #tpu.memory_space<vmem>>, %arg16: memref<1x32xf32, #tpu.memory_space<vmem>>, %arg17: memref<1x32xf32, #tpu.memory_space<vmem>>, %arg18: memref<1x32xf32, #tpu.memory_space<vmem>>, %arg19: memref<32x64xf32, #tpu.memory_space<vmem>>, %arg20: memref<1x64xf32, #tpu.memory_space<vmem>>, %arg21: memref<64x32xf32, #tpu.memory_space<vmem>>, %arg22: memref<1x32xf32, #tpu.memory_space<vmem>>, %arg23: memref<1x32xf32, #tpu.memory_space<vmem>>, %arg24: memref<1x32xf32, #tpu.memory_space<vmem>>, %arg25: memref<1x8x32xf32, #tpu.memory_space<vmem>>) attributes {dimension_semantics = [#tpu.dimension_semantics<parallel>], iteration_bounds = array<i64: 2>, scalar_prefetch = 0 : i64, scratch_operands = 0 : i64, tpu.core_type = #tpu.core_type<tc>, window_params = [{transform_indices = @transform_0, window_bounds = array<i64: 1, 8, 32>}, {transform_indices = @transform_1, window_bounds = array<i64: 1, 8, 32>}, {transform_indices = @transform_2, window_bounds = array<i64: 1, 8, 8>}, {transform_indices = @transform_3, window_bounds = array<i64: 1, 8, 8>}, {pipeline_mode = #tpu.pipeline_mode<synchronous>, transform_indices = @transform_4, window_bounds = array<i64: 32, 96>}, {pipeline_mode = #tpu.pipeline_mode<synchronous>, transform_indices = @transform_5, window_bounds = array<i64: 1, 96>}, {pipeline_mode = #tpu.pipeline_mode<synchronous>, transform_indices = @transform_6, window_bounds = array<i64: 32, 32>}, {pipeline_mode = #tpu.pipeline_mode<synchronous>, transform_indices = @transform_7, window_bounds = array<i64: 1, 32>}, {pipeline_mode = #tpu.pipeline_mode<synchronous>, transform_indices = @transform_8, window_bounds = array<i64: 1, 32>}, {pipeline_mode = #tpu.pipeline_mode<synchronous>, transform_indices = @transform_9, window_bounds = array<i64: 1, 32>}, {pipeline_mode = #tpu.pipeline_mode<synchronous>, transform_indices = @transform_10, window_bounds = array<i64: 32, 32>}, {pipeline_mode = #tpu.pipeline_mode<synchronous>, transform_indices = @transform_11, window_bounds = array<i64: 1, 32>}, {pipeline_mode = #tpu.pipeline_mode<synchronous>, transform_indices = @transform_12, window_bounds = array<i64: 32, 64>}, {pipeline_mode = #tpu.pipeline_mode<synchronous>, transform_indices = @transform_13, window_bounds = array<i64: 1, 64>}, {pipeline_mode = #tpu.pipeline_mode<synchronous>, transform_indices = @transform_14, window_bounds = array<i64: 32, 32>}, {pipeline_mode = #tpu.pipeline_mode<synchronous>, transform_indices = @transform_15, window_bounds = array<i64: 1, 32>}, {pipeline_mode = #tpu.pipeline_mode<synchronous>, transform_indices = @transform_16, window_bounds = array<i64: 1, 32>}, {pipeline_mode = #tpu.pipeline_mode<synchronous>, transform_indices = @transform_17, window_bounds = array<i64: 1, 32>}, {pipeline_mode = #tpu.pipeline_mode<synchronous>, transform_indices = @transform_18, window_bounds = array<i64: 32, 64>}, {pipeline_mode = #tpu.pipeline_mode<synchronous>, transform_indices = @transform_19, window_bounds = array<i64: 1, 64>}, {pipeline_mode = #tpu.pipeline_mode<synchronous>, transform_indices = @transform_20, window_bounds = array<i64: 64, 32>}, {pipeline_mode = #tpu.pipeline_mode<synchronous>, transform_indices = @transform_21, window_bounds = array<i64: 1, 32>}, {pipeline_mode = #tpu.pipeline_mode<synchronous>, transform_indices = @transform_22, window_bounds = array<i64: 1, 32>}, {pipeline_mode = #tpu.pipeline_mode<synchronous>, transform_indices = @transform_23, window_bounds = array<i64: 1, 32>}, {transform_indices = @transform_24, window_bounds = array<i64: 1, 8, 32>}]} {
    %c0 = arith.constant 0 : index
    %c0_0 = arith.constant 0 : index
    %c0_1 = arith.constant 0 : index
    %0 = vector.load %arg1[%c0, %c0_0, %c0_1] : memref<1x8x32xf32, #tpu.memory_space<vmem>>, vector<1x8x32xf32>
    %1 = vector.shape_cast %0 : vector<1x8x32xf32> to vector<8x32xf32>
    %c0_2 = arith.constant 0 : index
    %c0_3 = arith.constant 0 : index
    %c0_4 = arith.constant 0 : index
    %2 = vector.load %arg2[%c0_2, %c0_3, %c0_4] : memref<1x8x32xf32, #tpu.memory_space<vmem>>, vector<1x8x32xf32>
    %3 = vector.shape_cast %2 : vector<1x8x32xf32> to vector<8x32xf32>
    %c0_5 = arith.constant 0 : index
    %c0_6 = arith.constant 0 : index
    %4 = vector.load %arg5[%c0_5, %c0_6] : memref<32x96xf32, #tpu.memory_space<vmem>>, vector<32x96xf32>
    %cst = arith.constant dense<0.000000e+00> : vector<8x96xf32>
    %5 = tpu.matmul %1, %4, %cst {dimension_numbers = #tpu.dot_dimension_numbers<[1], [0], [0], [1], [0, 0, 1, 1], [], []>} : vector<8x32xf32>, vector<32x96xf32>, vector<8x96xf32> -> vector<8x96xf32>
    %c0_7 = arith.constant 0 : index
    %c0_8 = arith.constant 0 : index
    %6 = vector.load %arg6[%c0_7, %c0_8] : memref<1x96xf32, #tpu.memory_space<vmem>>, vector<1x96xf32>
    %7 = vector.broadcast %6 : vector<1x96xf32> to vector<8x96xf32>
    %8 = arith.addf %5, %7 : vector<8x96xf32>
    %9 = vector.extract_strided_slice %8 {offsets = [0, 0], sizes = [8, 32], strides = [1, 1]} : vector<8x96xf32> to vector<8x32xf32>
    %10 = vector.extract_strided_slice %8 {offsets = [0, 32], sizes = [8, 32], strides = [1, 1]} : vector<8x96xf32> to vector<8x32xf32>
    %11 = vector.extract_strided_slice %8 {offsets = [0, 64], sizes = [8, 32], strides = [1, 1]} : vector<8x96xf32> to vector<8x32xf32>
    %c0_9 = arith.constant 0 : index
    %c0_10 = arith.constant 0 : index
    %c0_11 = arith.constant 0 : index
    %12 = vector.load %arg3[%c0_9, %c0_10, %c0_11] : memref<1x8x8xf32, #tpu.memory_space<vmem>>, vector<1x8x8xf32>
    %13 = vector.shape_cast %12 : vector<1x8x8xf32> to vector<8x8xf32>
    %14 = vector.extract_strided_slice %9 {offsets = [0, 0], sizes = [8, 8], strides = [1, 1]} : vector<8x32xf32> to vector<8x8xf32>
    %15 = vector.extract_strided_slice %10 {offsets = [0, 0], sizes = [8, 8], strides = [1, 1]} : vector<8x32xf32> to vector<8x8xf32>
    %16 = vector.extract_strided_slice %11 {offsets = [0, 0], sizes = [8, 8], strides = [1, 1]} : vector<8x32xf32> to vector<8x8xf32>
    %cst_12 = arith.constant dense<0.000000e+00> : vector<8x8xf32>
    %17 = tpu.matmul %14, %15, %cst_12 {dimension_numbers = #tpu.dot_dimension_numbers<[1], [1], [0], [0], [0, 0, 1, 0], [], []>} : vector<8x8xf32>, vector<8x8xf32>, vector<8x8xf32> -> vector<8x8xf32>
    %cst_13 = arith.constant 0.353553385 : f32
    %18 = vector.broadcast %cst_13 : f32 to vector<8x8xf32>
    %19 = arith.mulf %17, %18 : vector<8x8xf32>
    %20 = arith.addf %19, %13 : vector<8x8xf32>
    %cst_14 = arith.constant dense<0xFF800000> : vector<8xf32>
    %21 = vector.multi_reduction <maximumf>, %20, %cst_14 [1] : vector<8x8xf32> to vector<8xf32>
    %22 = vector.shape_cast %21 : vector<8xf32> to vector<8x1xf32>
    %23 = vector.broadcast %22 : vector<8x1xf32> to vector<8x8xf32>
    %24 = arith.subf %20, %23 : vector<8x8xf32>
    %25 = math.exp %24 : vector<8x8xf32>
    %cst_15 = arith.constant dense<0.000000e+00> : vector<8xf32>
    %26 = vector.multi_reduction <add>, %25, %cst_15 [1] : vector<8x8xf32> to vector<8xf32>
    %27 = vector.shape_cast %26 : vector<8xf32> to vector<8x1xf32>
    %28 = tpu.reciprocal %27 {approx = true} : vector<8x1xf32> -> vector<8x1xf32>
    %29 = vector.broadcast %28 : vector<8x1xf32> to vector<8x8xf32>
    %30 = arith.mulf %25, %29 : vector<8x8xf32>
    %cst_16 = arith.constant dense<0.000000e+00> : vector<8x8xf32>
    %31 = tpu.matmul %30, %16, %cst_16 {dimension_numbers = #tpu.dot_dimension_numbers<[1], [0], [0], [1], [0, 0, 1, 1], [], []>} : vector<8x8xf32>, vector<8x8xf32>, vector<8x8xf32> -> vector<8x8xf32>
    %32 = vector.extract_strided_slice %9 {offsets = [0, 8], sizes = [8, 8], strides = [1, 1]} : vector<8x32xf32> to vector<8x8xf32>
    %33 = vector.extract_strided_slice %10 {offsets = [0, 8], sizes = [8, 8], strides = [1, 1]} : vector<8x32xf32> to vector<8x8xf32>
    %34 = vector.extract_strided_slice %11 {offsets = [0, 8], sizes = [8, 8], strides = [1, 1]} : vector<8x32xf32> to vector<8x8xf32>
    %cst_17 = arith.constant dense<0.000000e+00> : vector<8x8xf32>
    %35 = tpu.matmul %32, %33, %cst_17 {dimension_numbers = #tpu.dot_dimension_numbers<[1], [1], [0], [0], [0, 0, 1, 0], [], []>} : vector<8x8xf32>, vector<8x8xf32>, vector<8x8xf32> -> vector<8x8xf32>
    %cst_18 = arith.constant 0.353553385 : f32
    %36 = vector.broadcast %cst_18 : f32 to vector<8x8xf32>
    %37 = arith.mulf %35, %36 : vector<8x8xf32>
    %38 = arith.addf %37, %13 : vector<8x8xf32>
    %cst_19 = arith.constant dense<0xFF800000> : vector<8xf32>
    %39 = vector.multi_reduction <maximumf>, %38, %cst_19 [1] : vector<8x8xf32> to vector<8xf32>
    %40 = vector.shape_cast %39 : vector<8xf32> to vector<8x1xf32>
    %41 = vector.broadcast %40 : vector<8x1xf32> to vector<8x8xf32>
    %42 = arith.subf %38, %41 : vector<8x8xf32>
    %43 = math.exp %42 : vector<8x8xf32>
    %cst_20 = arith.constant dense<0.000000e+00> : vector<8xf32>
    %44 = vector.multi_reduction <add>, %43, %cst_20 [1] : vector<8x8xf32> to vector<8xf32>
    %45 = vector.shape_cast %44 : vector<8xf32> to vector<8x1xf32>
    %46 = tpu.reciprocal %45 {approx = true} : vector<8x1xf32> -> vector<8x1xf32>
    %47 = vector.broadcast %46 : vector<8x1xf32> to vector<8x8xf32>
    %48 = arith.mulf %43, %47 : vector<8x8xf32>
    %cst_21 = arith.constant dense<0.000000e+00> : vector<8x8xf32>
    %49 = tpu.matmul %48, %34, %cst_21 {dimension_numbers = #tpu.dot_dimension_numbers<[1], [0], [0], [1], [0, 0, 1, 1], [], []>} : vector<8x8xf32>, vector<8x8xf32>, vector<8x8xf32> -> vector<8x8xf32>
    %50 = vector.extract_strided_slice %9 {offsets = [0, 16], sizes = [8, 8], strides = [1, 1]} : vector<8x32xf32> to vector<8x8xf32>
    %51 = vector.extract_strided_slice %10 {offsets = [0, 16], sizes = [8, 8], strides = [1, 1]} : vector<8x32xf32> to vector<8x8xf32>
    %52 = vector.extract_strided_slice %11 {offsets = [0, 16], sizes = [8, 8], strides = [1, 1]} : vector<8x32xf32> to vector<8x8xf32>
    %cst_22 = arith.constant dense<0.000000e+00> : vector<8x8xf32>
    %53 = tpu.matmul %50, %51, %cst_22 {dimension_numbers = #tpu.dot_dimension_numbers<[1], [1], [0], [0], [0, 0, 1, 0], [], []>} : vector<8x8xf32>, vector<8x8xf32>, vector<8x8xf32> -> vector<8x8xf32>
    %cst_23 = arith.constant 0.353553385 : f32
    %54 = vector.broadcast %cst_23 : f32 to vector<8x8xf32>
    %55 = arith.mulf %53, %54 : vector<8x8xf32>
    %56 = arith.addf %55, %13 : vector<8x8xf32>
    %cst_24 = arith.constant dense<0xFF800000> : vector<8xf32>
    %57 = vector.multi_reduction <maximumf>, %56, %cst_24 [1] : vector<8x8xf32> to vector<8xf32>
    %58 = vector.shape_cast %57 : vector<8xf32> to vector<8x1xf32>
    %59 = vector.broadcast %58 : vector<8x1xf32> to vector<8x8xf32>
    %60 = arith.subf %56, %59 : vector<8x8xf32>
    %61 = math.exp %60 : vector<8x8xf32>
    %cst_25 = arith.constant dense<0.000000e+00> : vector<8xf32>
    %62 = vector.multi_reduction <add>, %61, %cst_25 [1] : vector<8x8xf32> to vector<8xf32>
    %63 = vector.shape_cast %62 : vector<8xf32> to vector<8x1xf32>
    %64 = tpu.reciprocal %63 {approx = true} : vector<8x1xf32> -> vector<8x1xf32>
    %65 = vector.broadcast %64 : vector<8x1xf32> to vector<8x8xf32>
    %66 = arith.mulf %61, %65 : vector<8x8xf32>
    %cst_26 = arith.constant dense<0.000000e+00> : vector<8x8xf32>
    %67 = tpu.matmul %66, %52, %cst_26 {dimension_numbers = #tpu.dot_dimension_numbers<[1], [0], [0], [1], [0, 0, 1, 1], [], []>} : vector<8x8xf32>, vector<8x8xf32>, vector<8x8xf32> -> vector<8x8xf32>
    %68 = vector.extract_strided_slice %9 {offsets = [0, 24], sizes = [8, 8], strides = [1, 1]} : vector<8x32xf32> to vector<8x8xf32>
    %69 = vector.extract_strided_slice %10 {offsets = [0, 24], sizes = [8, 8], strides = [1, 1]} : vector<8x32xf32> to vector<8x8xf32>
    %70 = vector.extract_strided_slice %11 {offsets = [0, 24], sizes = [8, 8], strides = [1, 1]} : vector<8x32xf32> to vector<8x8xf32>
    %cst_27 = arith.constant dense<0.000000e+00> : vector<8x8xf32>
    %71 = tpu.matmul %68, %69, %cst_27 {dimension_numbers = #tpu.dot_dimension_numbers<[1], [1], [0], [0], [0, 0, 1, 0], [], []>} : vector<8x8xf32>, vector<8x8xf32>, vector<8x8xf32> -> vector<8x8xf32>
    %cst_28 = arith.constant 0.353553385 : f32
    %72 = vector.broadcast %cst_28 : f32 to vector<8x8xf32>
    %73 = arith.mulf %71, %72 : vector<8x8xf32>
    %74 = arith.addf %73, %13 : vector<8x8xf32>
    %cst_29 = arith.constant dense<0xFF800000> : vector<8xf32>
    %75 = vector.multi_reduction <maximumf>, %74, %cst_29 [1] : vector<8x8xf32> to vector<8xf32>
    %76 = vector.shape_cast %75 : vector<8xf32> to vector<8x1xf32>
    %77 = vector.broadcast %76 : vector<8x1xf32> to vector<8x8xf32>
    %78 = arith.subf %74, %77 : vector<8x8xf32>
    %79 = math.exp %78 : vector<8x8xf32>
    %cst_30 = arith.constant dense<0.000000e+00> : vector<8xf32>
    %80 = vector.multi_reduction <add>, %79, %cst_30 [1] : vector<8x8xf32> to vector<8xf32>
    %81 = vector.shape_cast %80 : vector<8xf32> to vector<8x1xf32>
    %82 = tpu.reciprocal %81 {approx = true} : vector<8x1xf32> -> vector<8x1xf32>
    %83 = vector.broadcast %82 : vector<8x1xf32> to vector<8x8xf32>
    %84 = arith.mulf %79, %83 : vector<8x8xf32>
    %cst_31 = arith.constant dense<0.000000e+00> : vector<8x8xf32>
    %85 = tpu.matmul %84, %70, %cst_31 {dimension_numbers = #tpu.dot_dimension_numbers<[1], [0], [0], [1], [0, 0, 1, 1], [], []>} : vector<8x8xf32>, vector<8x8xf32>, vector<8x8xf32> -> vector<8x8xf32>
    %86 = tpu.concatenate %31, %49, %67, %85 in 1 : vector<8x8xf32>, vector<8x8xf32>, vector<8x8xf32>, vector<8x8xf32> -> vector<8x32xf32>
    %c0_32 = arith.constant 0 : index
    %c0_33 = arith.constant 0 : index
    %87 = vector.load %arg7[%c0_32, %c0_33] : memref<32x32xf32, #tpu.memory_space<vmem>>, vector<32x32xf32>
    %cst_34 = arith.constant dense<0.000000e+00> : vector<8x32xf32>
    %88 = tpu.matmul %86, %87, %cst_34 {dimension_numbers = #tpu.dot_dimension_numbers<[1], [0], [0], [1], [0, 0, 1, 1], [], []>} : vector<8x32xf32>, vector<32x32xf32>, vector<8x32xf32> -> vector<8x32xf32>
    %c0_35 = arith.constant 0 : index
    %c0_36 = arith.constant 0 : index
    %89 = vector.load %arg8[%c0_35, %c0_36] : memref<1x32xf32, #tpu.memory_space<vmem>>, vector<1x32xf32>
    %90 = vector.broadcast %89 : vector<1x32xf32> to vector<8x32xf32>
    %91 = arith.addf %88, %90 : vector<8x32xf32>
    %92 = arith.addf %1, %91 : vector<8x32xf32>
    %c0_37 = arith.constant 0 : index
    %c0_38 = arith.constant 0 : index
    %93 = vector.load %arg9[%c0_37, %c0_38] : memref<1x32xf32, #tpu.memory_space<vmem>>, vector<1x32xf32>
    %c0_39 = arith.constant 0 : index
    %c0_40 = arith.constant 0 : index
    %94 = vector.load %arg10[%c0_39, %c0_40] : memref<1x32xf32, #tpu.memory_space<vmem>>, vector<1x32xf32>
    %cst_41 = arith.constant dense<0.000000e+00> : vector<8xf32>
    %95 = vector.multi_reduction <add>, %92, %cst_41 [1] : vector<8x32xf32> to vector<8xf32>
    %96 = vector.shape_cast %95 : vector<8xf32> to vector<8x1xf32>
    %cst_42 = arith.constant 3.200000e+01 : f32
    %97 = vector.broadcast %cst_42 : f32 to vector<8x1xf32>
    %98 = arith.divf %96, %97 : vector<8x1xf32>
    %99 = vector.broadcast %98 : vector<8x1xf32> to vector<8x32xf32>
    %100 = arith.subf %92, %99 : vector<8x32xf32>
    %101 = arith.mulf %100, %100 : vector<8x32xf32>
    %cst_43 = arith.constant dense<0.000000e+00> : vector<8xf32>
    %102 = vector.multi_reduction <add>, %101, %cst_43 [1] : vector<8x32xf32> to vector<8xf32>
    %103 = vector.shape_cast %102 : vector<8xf32> to vector<8x1xf32>
    %cst_44 = arith.constant 3.200000e+01 : f32
    %104 = vector.broadcast %cst_44 : f32 to vector<8x1xf32>
    %105 = arith.divf %103, %104 : vector<8x1xf32>
    %106 = vector.broadcast %98 : vector<8x1xf32> to vector<8x32xf32>
    %107 = arith.subf %92, %106 : vector<8x32xf32>
    %cst_45 = arith.constant 9.99999974E-6 : f32
    %108 = vector.broadcast %cst_45 : f32 to vector<8x1xf32>
    %109 = arith.addf %105, %108 : vector<8x1xf32>
    %110 = math.rsqrt %109 : vector<8x1xf32>
    %111 = vector.broadcast %110 : vector<8x1xf32> to vector<8x32xf32>
    %112 = arith.mulf %107, %111 : vector<8x32xf32>
    %113 = vector.broadcast %93 : vector<1x32xf32> to vector<8x32xf32>
    %114 = arith.mulf %112, %113 : vector<8x32xf32>
    %115 = vector.broadcast %94 : vector<1x32xf32> to vector<8x32xf32>
    %116 = arith.addf %114, %115 : vector<8x32xf32>
    %c0_46 = arith.constant 0 : index
    %c0_47 = arith.constant 0 : index
    %117 = vector.load %arg11[%c0_46, %c0_47] : memref<32x32xf32, #tpu.memory_space<vmem>>, vector<32x32xf32>
    %cst_48 = arith.constant dense<0.000000e+00> : vector<8x32xf32>
    %118 = tpu.matmul %116, %117, %cst_48 {dimension_numbers = #tpu.dot_dimension_numbers<[1], [0], [0], [1], [0, 0, 1, 1], [], []>} : vector<8x32xf32>, vector<32x32xf32>, vector<8x32xf32> -> vector<8x32xf32>
    %c0_49 = arith.constant 0 : index
    %c0_50 = arith.constant 0 : index
    %119 = vector.load %arg12[%c0_49, %c0_50] : memref<1x32xf32, #tpu.memory_space<vmem>>, vector<1x32xf32>
    %120 = vector.broadcast %119 : vector<1x32xf32> to vector<8x32xf32>
    %121 = arith.addf %118, %120 : vector<8x32xf32>
    %c0_51 = arith.constant 0 : index
    %c0_52 = arith.constant 0 : index
    %122 = vector.load %arg13[%c0_51, %c0_52] : memref<32x64xf32, #tpu.memory_space<vmem>>, vector<32x64xf32>
    %cst_53 = arith.constant dense<0.000000e+00> : vector<8x64xf32>
    %123 = tpu.matmul %3, %122, %cst_53 {dimension_numbers = #tpu.dot_dimension_numbers<[1], [0], [0], [1], [0, 0, 1, 1], [], []>} : vector<8x32xf32>, vector<32x64xf32>, vector<8x64xf32> -> vector<8x64xf32>
    %c0_54 = arith.constant 0 : index
    %c0_55 = arith.constant 0 : index
    %124 = vector.load %arg14[%c0_54, %c0_55] : memref<1x64xf32, #tpu.memory_space<vmem>>, vector<1x64xf32>
    %125 = vector.broadcast %124 : vector<1x64xf32> to vector<8x64xf32>
    %126 = arith.addf %123, %125 : vector<8x64xf32>
    %127 = vector.extract_strided_slice %126 {offsets = [0, 0], sizes = [8, 32], strides = [1, 1]} : vector<8x64xf32> to vector<8x32xf32>
    %128 = vector.extract_strided_slice %126 {offsets = [0, 32], sizes = [8, 32], strides = [1, 1]} : vector<8x64xf32> to vector<8x32xf32>
    %c0_56 = arith.constant 0 : index
    %c0_57 = arith.constant 0 : index
    %c0_58 = arith.constant 0 : index
    %129 = vector.load %arg4[%c0_56, %c0_57, %c0_58] : memref<1x8x8xf32, #tpu.memory_space<vmem>>, vector<1x8x8xf32>
    %130 = vector.shape_cast %129 : vector<1x8x8xf32> to vector<8x8xf32>
    %131 = vector.extract_strided_slice %121 {offsets = [0, 0], sizes = [8, 8], strides = [1, 1]} : vector<8x32xf32> to vector<8x8xf32>
    %132 = vector.extract_strided_slice %127 {offsets = [0, 0], sizes = [8, 8], strides = [1, 1]} : vector<8x32xf32> to vector<8x8xf32>
    %133 = vector.extract_strided_slice %128 {offsets = [0, 0], sizes = [8, 8], strides = [1, 1]} : vector<8x32xf32> to vector<8x8xf32>
    %cst_59 = arith.constant dense<0.000000e+00> : vector<8x8xf32>
    %134 = tpu.matmul %131, %132, %cst_59 {dimension_numbers = #tpu.dot_dimension_numbers<[1], [1], [0], [0], [0, 0, 1, 0], [], []>} : vector<8x8xf32>, vector<8x8xf32>, vector<8x8xf32> -> vector<8x8xf32>
    %cst_60 = arith.constant 0.353553385 : f32
    %135 = vector.broadcast %cst_60 : f32 to vector<8x8xf32>
    %136 = arith.mulf %134, %135 : vector<8x8xf32>
    %137 = arith.addf %136, %130 : vector<8x8xf32>
    %cst_61 = arith.constant dense<0xFF800000> : vector<8xf32>
    %138 = vector.multi_reduction <maximumf>, %137, %cst_61 [1] : vector<8x8xf32> to vector<8xf32>
    %139 = vector.shape_cast %138 : vector<8xf32> to vector<8x1xf32>
    %140 = vector.broadcast %139 : vector<8x1xf32> to vector<8x8xf32>
    %141 = arith.subf %137, %140 : vector<8x8xf32>
    %142 = math.exp %141 : vector<8x8xf32>
    %cst_62 = arith.constant dense<0.000000e+00> : vector<8xf32>
    %143 = vector.multi_reduction <add>, %142, %cst_62 [1] : vector<8x8xf32> to vector<8xf32>
    %144 = vector.shape_cast %143 : vector<8xf32> to vector<8x1xf32>
    %145 = tpu.reciprocal %144 {approx = true} : vector<8x1xf32> -> vector<8x1xf32>
    %146 = vector.broadcast %145 : vector<8x1xf32> to vector<8x8xf32>
    %147 = arith.mulf %142, %146 : vector<8x8xf32>
    %cst_63 = arith.constant dense<0.000000e+00> : vector<8x8xf32>
    %148 = tpu.matmul %147, %133, %cst_63 {dimension_numbers = #tpu.dot_dimension_numbers<[1], [0], [0], [1], [0, 0, 1, 1], [], []>} : vector<8x8xf32>, vector<8x8xf32>, vector<8x8xf32> -> vector<8x8xf32>
    %149 = vector.extract_strided_slice %121 {offsets = [0, 8], sizes = [8, 8], strides = [1, 1]} : vector<8x32xf32> to vector<8x8xf32>
    %150 = vector.extract_strided_slice %127 {offsets = [0, 8], sizes = [8, 8], strides = [1, 1]} : vector<8x32xf32> to vector<8x8xf32>
    %151 = vector.extract_strided_slice %128 {offsets = [0, 8], sizes = [8, 8], strides = [1, 1]} : vector<8x32xf32> to vector<8x8xf32>
    %cst_64 = arith.constant dense<0.000000e+00> : vector<8x8xf32>
    %152 = tpu.matmul %149, %150, %cst_64 {dimension_numbers = #tpu.dot_dimension_numbers<[1], [1], [0], [0], [0, 0, 1, 0], [], []>} : vector<8x8xf32>, vector<8x8xf32>, vector<8x8xf32> -> vector<8x8xf32>
    %cst_65 = arith.constant 0.353553385 : f32
    %153 = vector.broadcast %cst_65 : f32 to vector<8x8xf32>
    %154 = arith.mulf %152, %153 : vector<8x8xf32>
    %155 = arith.addf %154, %130 : vector<8x8xf32>
    %cst_66 = arith.constant dense<0xFF800000> : vector<8xf32>
    %156 = vector.multi_reduction <maximumf>, %155, %cst_66 [1] : vector<8x8xf32> to vector<8xf32>
    %157 = vector.shape_cast %156 : vector<8xf32> to vector<8x1xf32>
    %158 = vector.broadcast %157 : vector<8x1xf32> to vector<8x8xf32>
    %159 = arith.subf %155, %158 : vector<8x8xf32>
    %160 = math.exp %159 : vector<8x8xf32>
    %cst_67 = arith.constant dense<0.000000e+00> : vector<8xf32>
    %161 = vector.multi_reduction <add>, %160, %cst_67 [1] : vector<8x8xf32> to vector<8xf32>
    %162 = vector.shape_cast %161 : vector<8xf32> to vector<8x1xf32>
    %163 = tpu.reciprocal %162 {approx = true} : vector<8x1xf32> -> vector<8x1xf32>
    %164 = vector.broadcast %163 : vector<8x1xf32> to vector<8x8xf32>
    %165 = arith.mulf %160, %164 : vector<8x8xf32>
    %cst_68 = arith.constant dense<0.000000e+00> : vector<8x8xf32>
    %166 = tpu.matmul %165, %151, %cst_68 {dimension_numbers = #tpu.dot_dimension_numbers<[1], [0], [0], [1], [0, 0, 1, 1], [], []>} : vector<8x8xf32>, vector<8x8xf32>, vector<8x8xf32> -> vector<8x8xf32>
    %167 = vector.extract_strided_slice %121 {offsets = [0, 16], sizes = [8, 8], strides = [1, 1]} : vector<8x32xf32> to vector<8x8xf32>
    %168 = vector.extract_strided_slice %127 {offsets = [0, 16], sizes = [8, 8], strides = [1, 1]} : vector<8x32xf32> to vector<8x8xf32>
    %169 = vector.extract_strided_slice %128 {offsets = [0, 16], sizes = [8, 8], strides = [1, 1]} : vector<8x32xf32> to vector<8x8xf32>
    %cst_69 = arith.constant dense<0.000000e+00> : vector<8x8xf32>
    %170 = tpu.matmul %167, %168, %cst_69 {dimension_numbers = #tpu.dot_dimension_numbers<[1], [1], [0], [0], [0, 0, 1, 0], [], []>} : vector<8x8xf32>, vector<8x8xf32>, vector<8x8xf32> -> vector<8x8xf32>
    %cst_70 = arith.constant 0.353553385 : f32
    %171 = vector.broadcast %cst_70 : f32 to vector<8x8xf32>
    %172 = arith.mulf %170, %171 : vector<8x8xf32>
    %173 = arith.addf %172, %130 : vector<8x8xf32>
    %cst_71 = arith.constant dense<0xFF800000> : vector<8xf32>
    %174 = vector.multi_reduction <maximumf>, %173, %cst_71 [1] : vector<8x8xf32> to vector<8xf32>
    %175 = vector.shape_cast %174 : vector<8xf32> to vector<8x1xf32>
    %176 = vector.broadcast %175 : vector<8x1xf32> to vector<8x8xf32>
    %177 = arith.subf %173, %176 : vector<8x8xf32>
    %178 = math.exp %177 : vector<8x8xf32>
    %cst_72 = arith.constant dense<0.000000e+00> : vector<8xf32>
    %179 = vector.multi_reduction <add>, %178, %cst_72 [1] : vector<8x8xf32> to vector<8xf32>
    %180 = vector.shape_cast %179 : vector<8xf32> to vector<8x1xf32>
    %181 = tpu.reciprocal %180 {approx = true} : vector<8x1xf32> -> vector<8x1xf32>
    %182 = vector.broadcast %181 : vector<8x1xf32> to vector<8x8xf32>
    %183 = arith.mulf %178, %182 : vector<8x8xf32>
    %cst_73 = arith.constant dense<0.000000e+00> : vector<8x8xf32>
    %184 = tpu.matmul %183, %169, %cst_73 {dimension_numbers = #tpu.dot_dimension_numbers<[1], [0], [0], [1], [0, 0, 1, 1], [], []>} : vector<8x8xf32>, vector<8x8xf32>, vector<8x8xf32> -> vector<8x8xf32>
    %185 = vector.extract_strided_slice %121 {offsets = [0, 24], sizes = [8, 8], strides = [1, 1]} : vector<8x32xf32> to vector<8x8xf32>
    %186 = vector.extract_strided_slice %127 {offsets = [0, 24], sizes = [8, 8], strides = [1, 1]} : vector<8x32xf32> to vector<8x8xf32>
    %187 = vector.extract_strided_slice %128 {offsets = [0, 24], sizes = [8, 8], strides = [1, 1]} : vector<8x32xf32> to vector<8x8xf32>
    %cst_74 = arith.constant dense<0.000000e+00> : vector<8x8xf32>
    %188 = tpu.matmul %185, %186, %cst_74 {dimension_numbers = #tpu.dot_dimension_numbers<[1], [1], [0], [0], [0, 0, 1, 0], [], []>} : vector<8x8xf32>, vector<8x8xf32>, vector<8x8xf32> -> vector<8x8xf32>
    %cst_75 = arith.constant 0.353553385 : f32
    %189 = vector.broadcast %cst_75 : f32 to vector<8x8xf32>
    %190 = arith.mulf %188, %189 : vector<8x8xf32>
    %191 = arith.addf %190, %130 : vector<8x8xf32>
    %cst_76 = arith.constant dense<0xFF800000> : vector<8xf32>
    %192 = vector.multi_reduction <maximumf>, %191, %cst_76 [1] : vector<8x8xf32> to vector<8xf32>
    %193 = vector.shape_cast %192 : vector<8xf32> to vector<8x1xf32>
    %194 = vector.broadcast %193 : vector<8x1xf32> to vector<8x8xf32>
    %195 = arith.subf %191, %194 : vector<8x8xf32>
    %196 = math.exp %195 : vector<8x8xf32>
    %cst_77 = arith.constant dense<0.000000e+00> : vector<8xf32>
    %197 = vector.multi_reduction <add>, %196, %cst_77 [1] : vector<8x8xf32> to vector<8xf32>
    %198 = vector.shape_cast %197 : vector<8xf32> to vector<8x1xf32>
    %199 = tpu.reciprocal %198 {approx = true} : vector<8x1xf32> -> vector<8x1xf32>
    %200 = vector.broadcast %199 : vector<8x1xf32> to vector<8x8xf32>
    %201 = arith.mulf %196, %200 : vector<8x8xf32>
    %cst_78 = arith.constant dense<0.000000e+00> : vector<8x8xf32>
    %202 = tpu.matmul %201, %187, %cst_78 {dimension_numbers = #tpu.dot_dimension_numbers<[1], [0], [0], [1], [0, 0, 1, 1], [], []>} : vector<8x8xf32>, vector<8x8xf32>, vector<8x8xf32> -> vector<8x8xf32>
    %203 = tpu.concatenate %148, %166, %184, %202 in 1 : vector<8x8xf32>, vector<8x8xf32>, vector<8x8xf32>, vector<8x8xf32> -> vector<8x32xf32>
    %c0_79 = arith.constant 0 : index
    %c0_80 = arith.constant 0 : index
    %204 = vector.load %arg15[%c0_79, %c0_80] : memref<32x32xf32, #tpu.memory_space<vmem>>, vector<32x32xf32>
    %cst_81 = arith.constant dense<0.000000e+00> : vector<8x32xf32>
    %205 = tpu.matmul %203, %204, %cst_81 {dimension_numbers = #tpu.dot_dimension_numbers<[1], [0], [0], [1], [0, 0, 1, 1], [], []>} : vector<8x32xf32>, vector<32x32xf32>, vector<8x32xf32> -> vector<8x32xf32>
    %c0_82 = arith.constant 0 : index
    %c0_83 = arith.constant 0 : index
    %206 = vector.load %arg16[%c0_82, %c0_83] : memref<1x32xf32, #tpu.memory_space<vmem>>, vector<1x32xf32>
    %207 = vector.broadcast %206 : vector<1x32xf32> to vector<8x32xf32>
    %208 = arith.addf %205, %207 : vector<8x32xf32>
    %209 = arith.addf %116, %208 : vector<8x32xf32>
    %c0_84 = arith.constant 0 : index
    %c0_85 = arith.constant 0 : index
    %210 = vector.load %arg17[%c0_84, %c0_85] : memref<1x32xf32, #tpu.memory_space<vmem>>, vector<1x32xf32>
    %c0_86 = arith.constant 0 : index
    %c0_87 = arith.constant 0 : index
    %211 = vector.load %arg18[%c0_86, %c0_87] : memref<1x32xf32, #tpu.memory_space<vmem>>, vector<1x32xf32>
    %cst_88 = arith.constant dense<0.000000e+00> : vector<8xf32>
    %212 = vector.multi_reduction <add>, %209, %cst_88 [1] : vector<8x32xf32> to vector<8xf32>
    %213 = vector.shape_cast %212 : vector<8xf32> to vector<8x1xf32>
    %cst_89 = arith.constant 3.200000e+01 : f32
    %214 = vector.broadcast %cst_89 : f32 to vector<8x1xf32>
    %215 = arith.divf %213, %214 : vector<8x1xf32>
    %216 = vector.broadcast %215 : vector<8x1xf32> to vector<8x32xf32>
    %217 = arith.subf %209, %216 : vector<8x32xf32>
    %218 = arith.mulf %217, %217 : vector<8x32xf32>
    %cst_90 = arith.constant dense<0.000000e+00> : vector<8xf32>
    %219 = vector.multi_reduction <add>, %218, %cst_90 [1] : vector<8x32xf32> to vector<8xf32>
    %220 = vector.shape_cast %219 : vector<8xf32> to vector<8x1xf32>
    %cst_91 = arith.constant 3.200000e+01 : f32
    %221 = vector.broadcast %cst_91 : f32 to vector<8x1xf32>
    %222 = arith.divf %220, %221 : vector<8x1xf32>
    %223 = vector.broadcast %215 : vector<8x1xf32> to vector<8x32xf32>
    %224 = arith.subf %209, %223 : vector<8x32xf32>
    %cst_92 = arith.constant 9.99999974E-6 : f32
    %225 = vector.broadcast %cst_92 : f32 to vector<8x1xf32>
    %226 = arith.addf %222, %225 : vector<8x1xf32>
    %227 = math.rsqrt %226 : vector<8x1xf32>
    %228 = vector.broadcast %227 : vector<8x1xf32> to vector<8x32xf32>
    %229 = arith.mulf %224, %228 : vector<8x32xf32>
    %230 = vector.broadcast %210 : vector<1x32xf32> to vector<8x32xf32>
    %231 = arith.mulf %229, %230 : vector<8x32xf32>
    %232 = vector.broadcast %211 : vector<1x32xf32> to vector<8x32xf32>
    %233 = arith.addf %231, %232 : vector<8x32xf32>
    %c0_93 = arith.constant 0 : index
    %c0_94 = arith.constant 0 : index
    %234 = vector.load %arg19[%c0_93, %c0_94] : memref<32x64xf32, #tpu.memory_space<vmem>>, vector<32x64xf32>
    %cst_95 = arith.constant dense<0.000000e+00> : vector<8x64xf32>
    %235 = tpu.matmul %233, %234, %cst_95 {dimension_numbers = #tpu.dot_dimension_numbers<[1], [0], [0], [1], [0, 0, 1, 1], [], []>} : vector<8x32xf32>, vector<32x64xf32>, vector<8x64xf32> -> vector<8x64xf32>
    %c0_96 = arith.constant 0 : index
    %c0_97 = arith.constant 0 : index
    %236 = vector.load %arg20[%c0_96, %c0_97] : memref<1x64xf32, #tpu.memory_space<vmem>>, vector<1x64xf32>
    %237 = vector.broadcast %236 : vector<1x64xf32> to vector<8x64xf32>
    %238 = arith.addf %235, %237 : vector<8x64xf32>
    %cst_98 = arith.constant 0.000000e+00 : f32
    %239 = vector.broadcast %cst_98 : f32 to vector<8x64xf32>
    %240 = arith.maximumf %238, %239 : vector<8x64xf32>
    %c0_99 = arith.constant 0 : index
    %c0_100 = arith.constant 0 : index
    %241 = vector.load %arg21[%c0_99, %c0_100] : memref<64x32xf32, #tpu.memory_space<vmem>>, vector<64x32xf32>
    %cst_101 = arith.constant dense<0.000000e+00> : vector<8x32xf32>
    %242 = tpu.matmul %240, %241, %cst_101 {dimension_numbers = #tpu.dot_dimension_numbers<[1], [0], [0], [1], [0, 0, 1, 1], [], []>} : vector<8x64xf32>, vector<64x32xf32>, vector<8x32xf32> -> vector<8x32xf32>
    %c0_102 = arith.constant 0 : index
    %c0_103 = arith.constant 0 : index
    %243 = vector.load %arg22[%c0_102, %c0_103] : memref<1x32xf32, #tpu.memory_space<vmem>>, vector<1x32xf32>
    %244 = vector.broadcast %243 : vector<1x32xf32> to vector<8x32xf32>
    %245 = arith.addf %242, %244 : vector<8x32xf32>
    %246 = arith.addf %233, %245 : vector<8x32xf32>
    %c0_104 = arith.constant 0 : index
    %c0_105 = arith.constant 0 : index
    %247 = vector.load %arg23[%c0_104, %c0_105] : memref<1x32xf32, #tpu.memory_space<vmem>>, vector<1x32xf32>
    %c0_106 = arith.constant 0 : index
    %c0_107 = arith.constant 0 : index
    %248 = vector.load %arg24[%c0_106, %c0_107] : memref<1x32xf32, #tpu.memory_space<vmem>>, vector<1x32xf32>
    %cst_108 = arith.constant dense<0.000000e+00> : vector<8xf32>
    %249 = vector.multi_reduction <add>, %246, %cst_108 [1] : vector<8x32xf32> to vector<8xf32>
    %250 = vector.shape_cast %249 : vector<8xf32> to vector<8x1xf32>
    %cst_109 = arith.constant 3.200000e+01 : f32
    %251 = vector.broadcast %cst_109 : f32 to vector<8x1xf32>
    %252 = arith.divf %250, %251 : vector<8x1xf32>
    %253 = vector.broadcast %252 : vector<8x1xf32> to vector<8x32xf32>
    %254 = arith.subf %246, %253 : vector<8x32xf32>
    %255 = arith.mulf %254, %254 : vector<8x32xf32>
    %cst_110 = arith.constant dense<0.000000e+00> : vector<8xf32>
    %256 = vector.multi_reduction <add>, %255, %cst_110 [1] : vector<8x32xf32> to vector<8xf32>
    %257 = vector.shape_cast %256 : vector<8xf32> to vector<8x1xf32>
    %cst_111 = arith.constant 3.200000e+01 : f32
    %258 = vector.broadcast %cst_111 : f32 to vector<8x1xf32>
    %259 = arith.divf %257, %258 : vector<8x1xf32>
    %260 = vector.broadcast %252 : vector<8x1xf32> to vector<8x32xf32>
    %261 = arith.subf %246, %260 : vector<8x32xf32>
    %cst_112 = arith.constant 9.99999974E-6 : f32
    %262 = vector.broadcast %cst_112 : f32 to vector<8x1xf32>
    %263 = arith.addf %259, %262 : vector<8x1xf32>
    %264 = math.rsqrt %263 : vector<8x1xf32>
    %265 = vector.broadcast %264 : vector<8x1xf32> to vector<8x32xf32>
    %266 = arith.mulf %261, %265 : vector<8x32xf32>
    %267 = vector.broadcast %247 : vector<1x32xf32> to vector<8x32xf32>
    %268 = arith.mulf %266, %267 : vector<8x32xf32>
    %269 = vector.broadcast %248 : vector<1x32xf32> to vector<8x32xf32>
    %270 = arith.addf %268, %269 : vector<8x32xf32>
    %c0_113 = arith.constant 0 : index
    %c0_114 = arith.constant 0 : index
    %c0_115 = arith.constant 0 : index
    %271 = vector.load %arg25[%c0_113, %c0_114, %c0_115] : memref<1x8x32xf32, #tpu.memory_space<vmem>>, vector<1x8x32xf32>
    %272 = vector.shape_cast %271 : vector<1x8x32xf32> to vector<8x32xf32>
    %273 = vector.shape_cast %270 : vector<8x32xf32> to vector<1x8x32xf32>
    tpu.vector_store %arg25[%c0_113, %c0_114, %c0_115], %273 {strides = array<i32>} : memref<1x8x32xf32, #tpu.memory_space<vmem>>, vector<1x8x32xf32>,
    return
  }
  func.func @transform_0(%arg0: i32) -> (i32, i32, i32) {
    %c0_i32 = arith.constant 0 : i32
    %c0_i32_0 = arith.constant 0 : i32
    %c0_i32_1 = arith.constant 0 : i32
    return %arg0, %c0_i32, %c0_i32_0 : i32, i32, i32
  }
  func.func @transform_1(%arg0: i32) -> (i32, i32, i32) {
    %c0_i32 = arith.constant 0 : i32
    %c0_i32_0 = arith.constant 0 : i32
    %c0_i32_1 = arith.constant 0 : i32
    return %arg0, %c0_i32, %c0_i32_0 : i32, i32, i32
  }
  func.func @transform_2(%arg0: i32) -> (i32, i32, i32) {
    %c0_i32 = arith.constant 0 : i32
    %c0_i32_0 = arith.constant 0 : i32
    %c0_i32_1 = arith.constant 0 : i32
    return %arg0, %c0_i32, %c0_i32_0 : i32, i32, i32
  }
  func.func @transform_3(%arg0: i32) -> (i32, i32, i32) {
    %c0_i32 = arith.constant 0 : i32
    %c0_i32_0 = arith.constant 0 : i32
    %c0_i32_1 = arith.constant 0 : i32
    return %arg0, %c0_i32, %c0_i32_0 : i32, i32, i32
  }
  func.func @transform_4(%arg0: i32) -> (i32, i32) {
    %c0_i32 = arith.constant 0 : i32
    %c0_i32_0 = arith.constant 0 : i32
    %c0_i32_1 = arith.constant 0 : i32
    return %c0_i32, %c0_i32_0 : i32, i32
  }
  func.func @transform_5(%arg0: i32) -> (i32, i32) {
    %c0_i32 = arith.constant 0 : i32
    %c0_i32_0 = arith.constant 0 : i32
    %c0_i32_1 = arith.constant 0 : i32
    return %c0_i32, %c0_i32_0 : i32, i32
  }
  func.func @transform_6(%arg0: i32) -> (i32, i32) {
    %c0_i32 = arith.constant 0 : i32
    %c0_i32_0 = arith.constant 0 : i32
    %c0_i32_1 = arith.constant 0 : i32
    return %c0_i32, %c0_i32_0 : i32, i32
  }
  func.func @transform_7(%arg0: i32) -> (i32, i32) {
    %c0_i32 = arith.constant 0 : i32
    %c0_i32_0 = arith.constant 0 : i32
    %c0_i32_1 = arith.constant 0 : i32
    return %c0_i32, %c0_i32_0 : i32, i32
  }
  func.func @transform_8(%arg0: i32) -> (i32, i32) {
    %c0_i32 = arith.constant 0 : i32
    %c0_i32_0 = arith.constant 0 : i32
    %c0_i32_1 = arith.constant 0 : i32
    return %c0_i32, %c0_i32_0 : i32, i32
  }
  func.func @transform_9(%arg0: i32) -> (i32, i32) {
    %c0_i32 = arith.constant 0 : i32
    %c0_i32_0 = arith.constant 0 : i32
    %c0_i32_1 = arith.constant 0 : i32
    return %c0_i32, %c0_i32_0 : i32, i32
  }
  func.func @transform_10(%arg0: i32) -> (i32, i32) {
    %c0_i32 = arith.constant 0 : i32
    %c0_i32_0 = arith.constant 0 : i32
    %c0_i32_1 = arith.constant 0 : i32
    return %c0_i32, %c0_i32_0 : i32, i32
  }
  func.func @transform_11(%arg0: i32) -> (i32, i32) {
    %c0_i32 = arith.constant 0 : i32
    %c0_i32_0 = arith.constant 0 : i32
    %c0_i32_1 = arith.constant 0 : i32
    return %c0_i32, %c0_i32_0 : i32, i32
  }
  func.func @transform_12(%arg0: i32) -> (i32, i32) {
    %c0_i32 = arith.constant 0 : i32
    %c0_i32_0 = arith.constant 0 : i32
    %c0_i32_1 = arith.constant 0 : i32
    return %c0_i32, %c0_i32_0 : i32, i32
  }
  func.func @transform_13(%arg0: i32) -> (i32, i32) {
    %c0_i32 = arith.constant 0 : i32
    %c0_i32_0 = arith.constant 0 : i32
    %c0_i32_1 = arith.constant 0 : i32
    return %c0_i32, %c0_i32_0 : i32, i32
  }
  func.func @transform_14(%arg0: i32) -> (i32, i32) {
    %c0_i32 = arith.constant 0 : i32
    %c0_i32_0 = arith.constant 0 : i32
    %c0_i32_1 = arith.constant 0 : i32
    return %c0_i32, %c0_i32_0 : i32, i32
  }
  func.func @transform_15(%arg0: i32) -> (i32, i32) {
    %c0_i32 = arith.constant 0 : i32
    %c0_i32_0 = arith.constant 0 : i32
    %c0_i32_1 = arith.constant 0 : i32
    return %c0_i32, %c0_i32_0 : i32, i32
  }
  func.func @transform_16(%arg0: i32) -> (i32, i32) {
    %c0_i32 = arith.constant 0 : i32
    %c0_i32_0 = arith.constant 0 : i32
    %c0_i32_1 = arith.constant 0 : i32
    return %c0_i32, %c0_i32_0 : i32, i32
  }
  func.func @transform_17(%arg0: i32) -> (i32, i32) {
    %c0_i32 = arith.constant 0 : i32
    %c0_i32_0 = arith.constant 0 : i32
    %c0_i32_1 = arith.constant 0 : i32
    return %c0_i32, %c0_i32_0 : i32, i32
  }
  func.func @transform_18(%arg0: i32) -> (i32, i32) {
    %c0_i32 = arith.constant 0 : i32
    %c0_i32_0 = arith.constant 0 : i32
    %c0_i32_1 = arith.constant 0 : i32
    return %c0_i32, %c0_i32_0 : i32, i32
  }
  func.func @transform_19(%arg0: i32) -> (i32, i32) {
    %c0_i32 = arith.constant 0 : i32
    %c0_i32_0 = arith.constant 0 : i32
    %c0_i32_1 = arith.constant 0 : i32
    return %c0_i32, %c0_i32_0 : i32, i32
  }
  func.func @transform_20(%arg0: i32) -> (i32, i32) {
    %c0_i32 = arith.constant 0 : i32
    %c0_i32_0 = arith.constant 0 : i32
    %c0_i32_1 = arith.constant 0 : i32
    return %c0_i32, %c0_i32_0 : i32, i32
  }
  func.func @transform_21(%arg0: i32) -> (i32, i32) {
    %c0_i32 = arith.constant 0 : i32
    %c0_i32_0 = arith.constant 0 : i32
    %c0_i32_1 = arith.constant 0 : i32
    return %c0_i32, %c0_i32_0 : i32, i32
  }
  func.func @transform_22(%arg0: i32) -> (i32, i32) {
    %c0_i32 = arith.constant 0 : i32
    %c0_i32_0 = arith.constant 0 : i32
    %c0_i32_1 = arith.constant 0 : i32
    return %c0_i32, %c0_i32_0 : i32, i32
  }
  func.func @transform_23(%arg0: i32) -> (i32, i32) {
    %c0_i32 = arith.constant 0 : i32
    %c0_i32_0 = arith.constant 0 : i32
    %c0_i32_1 = arith.constant 0 : i32
    return %c0_i32, %c0_i32_0 : i32, i32
  }
  func.func @transform_24(%arg0: i32) -> (i32, i32, i32) {
    %c0_i32 = arith.constant 0 : i32
    %c0_i32_0 = arith.constant 0 : i32
    %c0_i32_1 = arith.constant 0 : i32
    return %arg0, %c0_i32, %c0_i32_0 : i32, i32, i32
  }
}

</mosaic_0001>

<llo_original>
// kernel: tpu_custom_call.1
$region0: #{tpu_custom_call.1}
  #allocation0 [shape = 'u32[]', space=smem, size = 0x4, offset = 0x4, fixed_abs, tag = 'smem constant byte address 0x4 - core index']
  #allocation1 [shape = 'u32[72,128]{1,0:T(1,128)}', space=vmem, size = 0x9000, scoped, tag = 'internal scratch']
  %s0 = inlined_call_operand.hbm [shape: f32[2,8,32], index: 0, kind: input, shape index: {}]
  %s1 = inlined_call_operand.hbm [shape: f32[2,8,32], index: 1, kind: input, shape index: {}]
  %s2 = inlined_call_operand.hbm [shape: f32[2,8,8], index: 2, kind: input, shape index: {}]
  %s3 = inlined_call_operand.hbm [shape: f32[2,8,8], index: 3, kind: input, shape index: {}]
  %s4 = inlined_call_operand.vmem [shape: f32[32,96], index: 4, kind: input, shape index: {}]
  %s5 = inlined_call_operand.vmem [shape: f32[1,96], index: 5, kind: input, shape index: {}]
  %s6 = inlined_call_operand.vmem [shape: f32[32,32], index: 6, kind: input, shape index: {}]
  %s7 = inlined_call_operand.vmem [shape: f32[1,32], index: 7, kind: input, shape index: {}]
  %s8 = inlined_call_operand.vmem [shape: f32[1,32], index: 8, kind: input, shape index: {}]
  %s9 = inlined_call_operand.vmem [shape: f32[1,32], index: 9, kind: input, shape index: {}]
  %s10 = inlined_call_operand.vmem [shape: f32[32,32], index: 10, kind: input, shape index: {}]
  %s11 = inlined_call_operand.vmem [shape: f32[1,32], index: 11, kind: input, shape index: {}]
  %s12 = inlined_call_operand.hbm [shape: f32[32,64], index: 12, kind: input, shape index: {}]
  %s13 = inlined_call_operand.vmem [shape: f32[1,64], index: 13, kind: input, shape index: {}]
  %s14 = inlined_call_operand.hbm [shape: f32[32,32], index: 14, kind: input, shape index: {}]
  %s15 = inlined_call_operand.vmem [shape: f32[1,32], index: 15, kind: input, shape index: {}]
  %s16 = inlined_call_operand.vmem [shape: f32[1,32], index: 16, kind: input, shape index: {}]
  %s17 = inlined_call_operand.vmem [shape: f32[1,32], index: 17, kind: input, shape index: {}]
  %s18 = inlined_call_operand.hbm [shape: f32[32,64], index: 18, kind: input, shape index: {}]
  %s19 = inlined_call_operand.vmem [shape: f32[1,64], index: 19, kind: input, shape index: {}]
  %s20 = inlined_call_operand.vmem [shape: f32[64,32], index: 20, kind: input, shape index: {}]
  %s21 = inlined_call_operand.vmem [shape: f32[1,32], index: 21, kind: input, shape index: {}]
  %s22 = inlined_call_operand.vmem [shape: f32[1,32], index: 22, kind: input, shape index: {}]
  %s23 = inlined_call_operand.vmem [shape: f32[1,32], index: 23, kind: input, shape index: {}]
  %s24 = inlined_call_operand.hbm [shape: f32[2,8,32], index: 24, kind: output, shape index: {}]
  %s25 = sld [smem:[#allocation0]]
  $region157: #{tpu_custom_call.1} parent=0
    _
  %s27 = ssub.s32 1, %s25
  %s28 = scalar_select 0, %s27, %s25
  $region1: #{tpu_custom_call.1} parent=0
    #allocation2 [shape = 'u8[8192]{0}', space=vmem, size = 0x2000, scoped, tag = 'input window, operand 0']
    #allocation3 [shape = 's32[2]{0}', space=sflag, size = 0x8, scoped, tag = 'scoped memory for tpu_custom_call.1']
    #allocation4 [shape = 's32[2]{0}', space=sflag, size = 0x8, scoped, tag = 'scoped memory for tpu_custom_call.1']
    #allocation5 [shape = 'u8[8192]{0}', space=vmem, size = 0x2000, scoped, tag = 'input window, operand 1']
    #allocation6 [shape = 's32[2]{0}', space=sflag, size = 0x8, scoped, tag = 'scoped memory for tpu_custom_call.1']
    #allocation7 [shape = 'u8[8192]{0}', space=vmem, size = 0x2000, scoped, tag = 'input window, operand 2']
    #allocation8 [shape = 'u8[8192]{0}', space=vmem, size = 0x2000, scoped, tag = 'input window, operand 3']
    #allocation9 [shape = 's32[2]{0}', space=sflag, size = 0x8, scoped, tag = 'scoped memory for tpu_custom_call.1']
    #allocation10 [shape = 'u8[16384]{0}', space=vmem, size = 0x4000, scoped, tag = 'input window, operand 12, single buffered']
    #allocation11 [shape = 'u8[16384]{0}', space=vmem, size = 0x4000, scoped, tag = 'input window, operand 14, single buffered']
    #allocation12 [shape = 's32[1]{0}', space=sflag, size = 0x4, scoped, tag = 'scoped memory for tpu_custom_call.1']
    #allocation13 [shape = 'u8[16384]{0}', space=vmem, size = 0x4000, scoped, tag = 'input window, operand 18, single buffered']
    #allocation14 [shape = 'u8[8192]{0}', space=vmem, size = 0x2000, scoped, tag = 'output window, operand 0']
    %29 = vsyncpa [#allocation3], 0
    %s30 = scalar_lea.sflag [#allocation3], 1
    %31 = vsyncpa %s30, 0
    %32 = vsyncpa [#allocation6], 0
    %s33 = scalar_lea.sflag [#allocation6], 1
    %34 = vsyncpa %s33, 0
    %35 = vsyncpa [#allocation9], 0
    %s36 = scalar_lea.sflag [#allocation9], 1
    %37 = vsyncpa %s36, 0
    %38 = vsyncpa [#allocation12], 0
    %39 = vsyncpa [#allocation4], 0
    %s40 = scalar_lea.sflag [#allocation4], 1
    %41 = vsyncpa %s40, 0
    loop: start=0, step=1, limit=4
    $region2: #{tpu_custom_call.1} parent=1 // loop_pre_header
      _
    $region3: #{tpu_custom_call.1} parent=1 // loop_header
      %s43 = sphi 0, %s47
      %p44 = scmp.ge.s32.totalorder %s43, 4
      %s53 = sphi 0, %s55
      %s56 = sphi 0, %s53
      %s57 = sphi 0, %s56
      %s73 = sphi 0, %s57
      %s79 = sphi 0, %s81
      %s82 = sphi 0, %s79
      %s83 = sphi 0, %s82
      %s99 = sphi 0, %s83
      %s105 = sphi 0, %s107
      %s108 = sphi 0, %s105
      %s109 = sphi 0, %s108
      %s125 = sphi 0, %s109
      %s131 = sphi 0, %s133
      %s134 = sphi 0, %s131
      %s135 = sphi 0, %s134
      %s151 = sphi 0, %s135
      %s155 = sphi 0, %s155
      %s157 = sphi 0, %s155
      %s158 = sphi 0, %s157
      %s172 = sphi 0, %s158
      %s176 = sphi 0, %s176
      %s178 = sphi 0, %s176
      %s179 = sphi 0, %s178
      %s193 = sphi 0, %s179
      %s197 = sphi 0, %s197
      %s199 = sphi 0, %s197
      %s200 = sphi 0, %s199
      %s214 = sphi 0, %s200
      %s218 = sphi 0, %s218
      %s220 = sphi 0, %s218
      %s221 = sphi 0, %s220
      %s235 = sphi 0, %s221
      %s239 = sphi 0, %s239
      %s241 = sphi 0, %s239
      %s242 = sphi 0, %s241
      %s256 = sphi 0, %s242
      %s260 = sphi 0, %s260
      %s262 = sphi 0, %s260
      %s263 = sphi 0, %s262
      %s277 = sphi 0, %s263
      %s281 = sphi 0, %s281
      %s283 = sphi 0, %s281
      %s284 = sphi 0, %s283
      %s298 = sphi 0, %s284
      %s302 = sphi 0, %s302
      %s304 = sphi 0, %s302
      %s305 = sphi 0, %s304
      %s319 = sphi 0, %s305
      %s323 = sphi 0, %s323
      %s325 = sphi 0, %s323
      %s326 = sphi 0, %s325
      %s340 = sphi 0, %s326
      %s344 = sphi 0, %s344
      %s346 = sphi 0, %s344
      %s347 = sphi 0, %s346
      %s361 = sphi 0, %s347
      %s365 = sphi 0, %s365
      %s367 = sphi 0, %s365
      %s368 = sphi 0, %s367
      %s382 = sphi 0, %s368
      %s386 = sphi 0, %s386
      %s388 = sphi 0, %s386
      %s389 = sphi 0, %s388
      %s403 = sphi 0, %s389
      %s407 = sphi 0, %s407
      %s409 = sphi 0, %s407
      %s410 = sphi 0, %s409
      %s424 = sphi 0, %s410
      %s428 = sphi 0, %s428
      %s430 = sphi 0, %s428
      %s431 = sphi 0, %s430
      %s445 = sphi 0, %s431
      %s449 = sphi 0, %s449
      %s451 = sphi 0, %s449
      %s452 = sphi 0, %s451
      %s466 = sphi 0, %s452
      %s470 = sphi 0, %s470
      %s472 = sphi 0, %s470
      %s473 = sphi 0, %s472
      %s487 = sphi 0, %s473
      %s491 = sphi 0, %s491
      %s493 = sphi 0, %s491
      %s494 = sphi 0, %s493
      %s508 = sphi 0, %s494
      %s512 = sphi 0, %s512
      %s514 = sphi 0, %s512
      %s515 = sphi 0, %s514
      %s529 = sphi 0, %s515
      %s533 = sphi 0, %s533
      %s535 = sphi 0, %s533
      %s536 = sphi 0, %s535
      %s550 = sphi 0, %s536
      %s554 = sphi 0, %s554
      %s556 = sphi 0, %s554
      %s557 = sphi 0, %s556
      %s571 = sphi 0, %s557
      %s577 = sphi 0, %s579
      %s580 = sphi 0, %s577
      %s581 = sphi 0, %s580
      %s597 = sphi 0, %s581
    $region4: #{tpu_custom_call.1} parent=1 // loop_header_branch
      %46 = sbr.rel (%p44) target = $region8
    $region5: #{tpu_custom_call.1} parent=1 // loop_body
      %s48 = ssub.s32 %s43, 1
      %s49 = ssub.s32 %s43, 2
      %s50 = sadd.s32 %s43, 1
      %s51 = ssub.s32 %s43, %s50
      %p52 = scmp.eq.s32.totalorder %s51, 0
      %s54 = sadd.s32 %s53, 1
      %s55 = scalar_select %p52, %s53, %s54
      %p58 = pneg %p52
      %p59 = scmp.eq.s32.totalorder %s43, 1
      %p60 = por %p58, %p59
      %p61 = scmp.ne.s32.totalorder %s53, %s56
      %p62 = scmp.eq.s32.totalorder %s43, 0
      %p63 = por %p61, %p62
      %p64 = scmp.ne.s32.totalorder %s53, %s56
      %p65 = scmp.eq.s32.totalorder %s48, 1
      %p66 = por %p64, %p65
      %p67 = scmp.ne.s32.totalorder %s56, %s57
      %p68 = scmp.eq.s32.totalorder %s48, 0
      %p69 = por %p67, %p68
      %p70 = scmp.ne.s32.totalorder %s56, %s57
      %p71 = scmp.eq.s32.totalorder %s49, 1
      %p72 = por %p70, %p71
      %p74 = scmp.ne.s32.totalorder %s57, %s73
      %p75 = scmp.eq.s32.totalorder %s49, 0
      %p76 = por %p74, %p75
      %s77 = ssub.s32 %s43, %s50
      %p78 = scmp.eq.s32.totalorder %s77, 0
      %s80 = sadd.s32 %s79, 1
      %s81 = scalar_select %p78, %s79, %s80
      %p84 = pneg %p78
      %p85 = scmp.eq.s32.totalorder %s43, 1
      %p86 = por %p84, %p85
      %p87 = scmp.ne.s32.totalorder %s79, %s82
      %p88 = scmp.eq.s32.totalorder %s43, 0
      %p89 = por %p87, %p88
      %p90 = scmp.ne.s32.totalorder %s79, %s82
      %p91 = scmp.eq.s32.totalorder %s48, 1
      %p92 = por %p90, %p91
      %p93 = scmp.ne.s32.totalorder %s82, %s83
      %p94 = scmp.eq.s32.totalorder %s48, 0
      %p95 = por %p93, %p94
      %p96 = scmp.ne.s32.totalorder %s82, %s83
      %p97 = scmp.eq.s32.totalorder %s49, 1
      %p98 = por %p96, %p97
      %p100 = scmp.ne.s32.totalorder %s83, %s99
      %p101 = scmp.eq.s32.totalorder %s49, 0
      %p102 = por %p100, %p101
      %s103 = ssub.s32 %s43, %s50
      %p104 = scmp.eq.s32.totalorder %s103, 0
      %s106 = sadd.s32 %s105, 1
      %s107 = scalar_select %p104, %s105, %s106
      %p110 = pneg %p104
      %p111 = scmp.eq.s32.totalorder %s43, 1
      %p112 = por %p110, %p111
      %p113 = scmp.ne.s32.totalorder %s105, %s108
      %p114 = scmp.eq.s32.totalorder %s43, 0
      %p115 = por %p113, %p114
      %p116 = scmp.ne.s32.totalorder %s105, %s108
      %p117 = scmp.eq.s32.totalorder %s48, 1
      %p118 = por %p116, %p117
      %p119 = scmp.ne.s32.totalorder %s108, %s109
      %p120 = scmp.eq.s32.totalorder %s48, 0
      %p121 = por %p119, %p120
      %p122 = scmp.ne.s32.totalorder %s108, %s109
      %p123 = scmp.eq.s32.totalorder %s49, 1
      %p124 = por %p122, %p123
      %p126 = scmp.ne.s32.totalorder %s109, %s125
      %p127 = scmp.eq.s32.totalorder %s49, 0
      %p128 = por %p126, %p127
      %s129 = ssub.s32 %s43, %s50
      %p130 = scmp.eq.s32.totalorder %s129, 0
      %s132 = sadd.s32 %s131, 1
      %s133 = scalar_select %p130, %s131, %s132
      %p136 = pneg %p130
      %p137 = scmp.eq.s32.totalorder %s43, 1
      %p138 = por %p136, %p137
      %p139 = scmp.ne.s32.totalorder %s131, %s134
      %p140 = scmp.eq.s32.totalorder %s43, 0
      %p141 = por %p139, %p140
      %p142 = scmp.ne.s32.totalorder %s131, %s134
      %p143 = scmp.eq.s32.totalorder %s48, 1
      %p144 = por %p142, %p143
      %p145 = scmp.ne.s32.totalorder %s134, %s135
      %p146 = scmp.eq.s32.totalorder %s48, 0
      %p147 = por %p145, %p146
      %p148 = scmp.ne.s32.totalorder %s134, %s135
      %p149 = scmp.eq.s32.totalorder %s49, 1
      %p150 = por %p148, %p149
      %p152 = scmp.ne.s32.totalorder %s135, %s151
      %p153 = scmp.eq.s32.totalorder %s49, 0
      %p154 = por %p152, %p153
      %s156 = sadd.s32 %s155, 1
      %p159 = scmp.eq.s32.totalorder %s43, 1
      %p160 = scmp.ne.s32.totalorder %s155, %s157
      %p161 = scmp.eq.s32.totalorder %s43, 0
      %p162 = por %p160, %p161
      %p163 = scmp.ne.s32.totalorder %s155, %s157
      %p164 = scmp.eq.s32.totalorder %s48, 1
      %p165 = por %p163, %p164
      %p166 = scmp.ne.s32.totalorder %s157, %s158
      %p167 = scmp.eq.s32.totalorder %s48, 0
      %p168 = por %p166, %p167
      %p169 = scmp.ne.s32.totalorder %s157, %s158
      %p170 = scmp.eq.s32.totalorder %s49, 1
      %p171 = por %p169, %p170
      %p173 = scmp.ne.s32.totalorder %s158, %s172
      %p174 = scmp.eq.s32.totalorder %s49, 0
      %p175 = por %p173, %p174
      %s177 = sadd.s32 %s176, 1
      %p180 = scmp.eq.s32.totalorder %s43, 1
      %p181 = scmp.ne.s32.totalorder %s176, %s178
      %p182 = scmp.eq.s32.totalorder %s43, 0
      %p183 = por %p181, %p182
      %p184 = scmp.ne.s32.totalorder %s176, %s178
      %p185 = scmp.eq.s32.totalorder %s48, 1
      %p186 = por %p184, %p185
      %p187 = scmp.ne.s32.totalorder %s178, %s179
      %p188 = scmp.eq.s32.totalorder %s48, 0
      %p189 = por %p187, %p188
      %p190 = scmp.ne.s32.totalorder %s178, %s179
      %p191 = scmp.eq.s32.totalorder %s49, 1
      %p192 = por %p190, %p191
      %p194 = scmp.ne.s32.totalorder %s179, %s193
      %p195 = scmp.eq.s32.totalorder %s49, 0
      %p196 = por %p194, %p195
      %s198 = sadd.s32 %s197, 1
      %p201 = scmp.eq.s32.totalorder %s43, 1
      %p202 = scmp.ne.s32.totalorder %s197, %s199
      %p203 = scmp.eq.s32.totalorder %s43, 0
      %p204 = por %p202, %p203
      %p205 = scmp.ne.s32.totalorder %s197, %s199
      %p206 = scmp.eq.s32.totalorder %s48, 1
      %p207 = por %p205, %p206
      %p208 = scmp.ne.s32.totalorder %s199, %s200
      %p209 = scmp.eq.s32.totalorder %s48, 0
      %p210 = por %p208, %p209
      %p211 = scmp.ne.s32.totalorder %s199, %s200
      %p212 = scmp.eq.s32.totalorder %s49, 1
      %p213 = por %p211, %p212
      %p215 = scmp.ne.s32.totalorder %s200, %s214
      %p216 = scmp.eq.s32.totalorder %s49, 0
      %p217 = por %p215, %p216
      %s219 = sadd.s32 %s218, 1
      %p222 = scmp.eq.s32.totalorder %s43, 1
      %p223 = scmp.ne.s32.totalorder %s218, %s220
      %p224 = scmp.eq.s32.totalorder %s43, 0
      %p225 = por %p223, %p224
      %p226 = scmp.ne.s32.totalorder %s218, %s220
      %p227 = scmp.eq.s32.totalorder %s48, 1
      %p228 = por %p226, %p227
      %p229 = scmp.ne.s32.totalorder %s220, %s221
      %p230 = scmp.eq.s32.totalorder %s48, 0
      %p231 = por %p229, %p230
      %p232 = scmp.ne.s32.totalorder %s220, %s221
      %p233 = scmp.eq.s32.totalorder %s49, 1
      %p234 = por %p232, %p233
      %p236 = scmp.ne.s32.totalorder %s221, %s235
      %p237 = scmp.eq.s32.totalorder %s49, 0
      %p238 = por %p236, %p237
      %s240 = sadd.s32 %s239, 1
      %p243 = scmp.eq.s32.totalorder %s43, 1
      %p244 = scmp.ne.s32.totalorder %s239, %s241
      %p245 = scmp.eq.s32.totalorder %s43, 0
      %p246 = por %p244, %p245
      %p247 = scmp.ne.s32.totalorder %s239, %s241
      %p248 = scmp.eq.s32.totalorder %s48, 1
      %p249 = por %p247, %p248
      %p250 = scmp.ne.s32.totalorder %s241, %s242
      %p251 = scmp.eq.s32.totalorder %s48, 0
      %p252 = por %p250, %p251
      %p253 = scmp.ne.s32.totalorder %s241, %s242
      %p254 = scmp.eq.s32.totalorder %s49, 1
      %p255 = por %p253, %p254
      %p257 = scmp.ne.s32.totalorder %s242, %s256
      %p258 = scmp.eq.s32.totalorder %s49, 0
      %p259 = por %p257, %p258
      %s261 = sadd.s32 %s260, 1
      %p264 = scmp.eq.s32.totalorder %s43, 1
      %p265 = scmp.ne.s32.totalorder %s260, %s262
      %p266 = scmp.eq.s32.totalorder %s43, 0
      %p267 = por %p265, %p266
      %p268 = scmp.ne.s32.totalorder %s260, %s262
      %p269 = scmp.eq.s32.totalorder %s48, 1
      %p270 = por %p268, %p269
      %p271 = scmp.ne.s32.totalorder %s262, %s263
      %p272 = scmp.eq.s32.totalorder %s48, 0
      %p273 = por %p271, %p272
      %p274 = scmp.ne.s32.totalorder %s262, %s263
      %p275 = scmp.eq.s32.totalorder %s49, 1
      %p276 = por %p274, %p275
      %p278 = scmp.ne.s32.totalorder %s263, %s277
      %p279 = scmp.eq.s32.totalorder %s49, 0
      %p280 = por %p278, %p279
      %s282 = sadd.s32 %s281, 1
      %p285 = scmp.eq.s32.totalorder %s43, 1
      %p286 = scmp.ne.s32.totalorder %s281, %s283
      %p287 = scmp.eq.s32.totalorder %s43, 0
      %p288 = por %p286, %p287
      %p289 = scmp.ne.s32.totalorder %s281, %s283
      %p290 = scmp.eq.s32.totalorder %s48, 1
      %p291 = por %p289, %p290
      %p292 = scmp.ne.s32.totalorder %s283, %s284
      %p293 = scmp.eq.s32.totalorder %s48, 0
      %p294 = por %p292, %p293
      %p295 = scmp.ne.s32.totalorder %s283, %s284
      %p296 = scmp.eq.s32.totalorder %s49, 1
      %p297 = por %p295, %p296
      %p299 = scmp.ne.s32.totalorder %s284, %s298
      %p300 = scmp.eq.s32.totalorder %s49, 0
      %p301 = por %p299, %p300
      %s303 = sadd.s32 %s302, 1
      %p306 = scmp.eq.s32.totalorder %s43, 1
      %p307 = scmp.ne.s32.totalorder %s302, %s304
      %p308 = scmp.eq.s32.totalorder %s43, 0
      %p309 = por %p307, %p308
      %p310 = scmp.ne.s32.totalorder %s302, %s304
      %p311 = scmp.eq.s32.totalorder %s48, 1
      %p312 = por %p310, %p311
      %p313 = scmp.ne.s32.totalorder %s304, %s305
      %p314 = scmp.eq.s32.totalorder %s48, 0
      %p315 = por %p313, %p314
      %p316 = scmp.ne.s32.totalorder %s304, %s305
      %p317 = scmp.eq.s32.totalorder %s49, 1
      %p318 = por %p316, %p317
      %p320 = scmp.ne.s32.totalorder %s305, %s319
      %p321 = scmp.eq.s32.totalorder %s49, 0
      %p322 = por %p320, %p321
      %s324 = sadd.s32 %s323, 1
      %p327 = scmp.eq.s32.totalorder %s43, 1
      %p328 = scmp.ne.s32.totalorder %s323, %s325
      %p329 = scmp.eq.s32.totalorder %s43, 0
      %p330 = por %p328, %p329
      %p331 = scmp.ne.s32.totalorder %s323, %s325
      %p332 = scmp.eq.s32.totalorder %s48, 1
      %p333 = por %p331, %p332
      %p334 = scmp.ne.s32.totalorder %s325, %s326
      %p335 = scmp.eq.s32.totalorder %s48, 0
      %p336 = por %p334, %p335
      %p337 = scmp.ne.s32.totalorder %s325, %s326
      %p338 = scmp.eq.s32.totalorder %s49, 1
      %p339 = por %p337, %p338
      %p341 = scmp.ne.s32.totalorder %s326, %s340
      %p342 = scmp.eq.s32.totalorder %s49, 0
      %p343 = por %p341, %p342
      %s345 = sadd.s32 %s344, 1
      %p348 = scmp.eq.s32.totalorder %s43, 1
      %p349 = scmp.ne.s32.totalorder %s344, %s346
      %p350 = scmp.eq.s32.totalorder %s43, 0
      %p351 = por %p349, %p350
      %p352 = scmp.ne.s32.totalorder %s344, %s346
      %p353 = scmp.eq.s32.totalorder %s48, 1
      %p354 = por %p352, %p353
      %p355 = scmp.ne.s32.totalorder %s346, %s347
      %p356 = scmp.eq.s32.totalorder %s48, 0
      %p357 = por %p355, %p356
      %p358 = scmp.ne.s32.totalorder %s346, %s347
      %p359 = scmp.eq.s32.totalorder %s49, 1
      %p360 = por %p358, %p359
      %p362 = scmp.ne.s32.totalorder %s347, %s361
      %p363 = scmp.eq.s32.totalorder %s49, 0
      %p364 = por %p362, %p363
      %s366 = sadd.s32 %s365, 1
      %p369 = scmp.eq.s32.totalorder %s43, 1
      %p370 = scmp.ne.s32.totalorder %s365, %s367
      %p371 = scmp.eq.s32.totalorder %s43, 0
      %p372 = por %p370, %p371
      %p373 = scmp.ne.s32.totalorder %s365, %s367
      %p374 = scmp.eq.s32.totalorder %s48, 1
      %p375 = por %p373, %p374
      %p376 = scmp.ne.s32.totalorder %s367, %s368
      %p377 = scmp.eq.s32.totalorder %s48, 0
      %p378 = por %p376, %p377
      %p379 = scmp.ne.s32.totalorder %s367, %s368
      %p380 = scmp.eq.s32.totalorder %s49, 1
      %p381 = por %p379, %p380
      %p383 = scmp.ne.s32.totalorder %s368, %s382
      %p384 = scmp.eq.s32.totalorder %s49, 0
      %p385 = por %p383, %p384
      %s387 = sadd.s32 %s386, 1
      %p390 = scmp.eq.s32.totalorder %s43, 1
      %p391 = scmp.ne.s32.totalorder %s386, %s388
      %p392 = scmp.eq.s32.totalorder %s43, 0
      %p393 = por %p391, %p392
      %p394 = scmp.ne.s32.totalorder %s386, %s388
      %p395 = scmp.eq.s32.totalorder %s48, 1
      %p396 = por %p394, %p395
      %p397 = scmp.ne.s32.totalorder %s388, %s389
      %p398 = scmp.eq.s32.totalorder %s48, 0
      %p399 = por %p397, %p398
      %p400 = scmp.ne.s32.totalorder %s388, %s389
      %p401 = scmp.eq.s32.totalorder %s49, 1
      %p402 = por %p400, %p401
      %p404 = scmp.ne.s32.totalorder %s389, %s403
      %p405 = scmp.eq.s32.totalorder %s49, 0
      %p406 = por %p404, %p405
      %s408 = sadd.s32 %s407, 1
      %p411 = scmp.eq.s32.totalorder %s43, 1
      %p412 = scmp.ne.s32.totalorder %s407, %s409
      %p413 = scmp.eq.s32.totalorder %s43, 0
      %p414 = por %p412, %p413
      %p415 = scmp.ne.s32.totalorder %s407, %s409
      %p416 = scmp.eq.s32.totalorder %s48, 1
      %p417 = por %p415, %p416
      %p418 = scmp.ne.s32.totalorder %s409, %s410
      %p419 = scmp.eq.s32.totalorder %s48, 0
      %p420 = por %p418, %p419
      %p421 = scmp.ne.s32.totalorder %s409, %s410
      %p422 = scmp.eq.s32.totalorder %s49, 1
      %p423 = por %p421, %p422
      %p425 = scmp.ne.s32.totalorder %s410, %s424
      %p426 = scmp.eq.s32.totalorder %s49, 0
      %p427 = por %p425, %p426
      %s429 = sadd.s32 %s428, 1
      %p432 = scmp.eq.s32.totalorder %s43, 1
      %p433 = scmp.ne.s32.totalorder %s428, %s430
      %p434 = scmp.eq.s32.totalorder %s43, 0
      %p435 = por %p433, %p434
      %p436 = scmp.ne.s32.totalorder %s428, %s430
      %p437 = scmp.eq.s32.totalorder %s48, 1
      %p438 = por %p436, %p437
      %p439 = scmp.ne.s32.totalorder %s430, %s431
      %p440 = scmp.eq.s32.totalorder %s48, 0
      %p441 = por %p439, %p440
      %p442 = scmp.ne.s32.totalorder %s430, %s431
      %p443 = scmp.eq.s32.totalorder %s49, 1
      %p444 = por %p442, %p443
      %p446 = scmp.ne.s32.totalorder %s431, %s445
      %p447 = scmp.eq.s32.totalorder %s49, 0
      %p448 = por %p446, %p447
      %s450 = sadd.s32 %s449, 1
      %p453 = scmp.eq.s32.totalorder %s43, 1
      %p454 = scmp.ne.s32.totalorder %s449, %s451
      %p455 = scmp.eq.s32.totalorder %s43, 0
      %p456 = por %p454, %p455
      %p457 = scmp.ne.s32.totalorder %s449, %s451
      %p458 = scmp.eq.s32.totalorder %s48, 1
      %p459 = por %p457, %p458
      %p460 = scmp.ne.s32.totalorder %s451, %s452
      %p461 = scmp.eq.s32.totalorder %s48, 0
      %p462 = por %p460, %p461
      %p463 = scmp.ne.s32.totalorder %s451, %s452
      %p464 = scmp.eq.s32.totalorder %s49, 1
      %p465 = por %p463, %p464
      %p467 = scmp.ne.s32.totalorder %s452, %s466
      %p468 = scmp.eq.s32.totalorder %s49, 0
      %p469 = por %p467, %p468
      %s471 = sadd.s32 %s470, 1
      %p474 = scmp.eq.s32.totalorder %s43, 1
      %p475 = scmp.ne.s32.totalorder %s470, %s472
      %p476 = scmp.eq.s32.totalorder %s43, 0
      %p477 = por %p475, %p476
      %p478 = scmp.ne.s32.totalorder %s470, %s472
      %p479 = scmp.eq.s32.totalorder %s48, 1
      %p480 = por %p478, %p479
      %p481 = scmp.ne.s32.totalorder %s472, %s473
      %p482 = scmp.eq.s32.totalorder %s48, 0
      %p483 = por %p481, %p482
      %p484 = scmp.ne.s32.totalorder %s472, %s473
      %p485 = scmp.eq.s32.totalorder %s49, 1
      %p486 = por %p484, %p485
      %p488 = scmp.ne.s32.totalorder %s473, %s487
      %p489 = scmp.eq.s32.totalorder %s49, 0
      %p490 = por %p488, %p489
      %s492 = sadd.s32 %s491, 1
      %p495 = scmp.eq.s32.totalorder %s43, 1
      %p496 = scmp.ne.s32.totalorder %s491, %s493
      %p497 = scmp.eq.s32.totalorder %s43, 0
      %p498 = por %p496, %p497
      %p499 = scmp.ne.s32.totalorder %s491, %s493
      %p500 = scmp.eq.s32.totalorder %s48, 1
      %p501 = por %p499, %p500
      %p502 = scmp.ne.s32.totalorder %s493, %s494
      %p503 = scmp.eq.s32.totalorder %s48, 0
      %p504 = por %p502, %p503
      %p505 = scmp.ne.s32.totalorder %s493, %s494
      %p506 = scmp.eq.s32.totalorder %s49, 1
      %p507 = por %p505, %p506
      %p509 = scmp.ne.s32.totalorder %s494, %s508
      %p510 = scmp.eq.s32.totalorder %s49, 0
      %p511 = por %p509, %p510
      %s513 = sadd.s32 %s512, 1
      %p516 = scmp.eq.s32.totalorder %s43, 1
      %p517 = scmp.ne.s32.totalorder %s512, %s514
      %p518 = scmp.eq.s32.totalorder %s43, 0
      %p519 = por %p517, %p518
      %p520 = scmp.ne.s32.totalorder %s512, %s514
      %p521 = scmp.eq.s32.totalorder %s48, 1
      %p522 = por %p520, %p521
      %p523 = scmp.ne.s32.totalorder %s514, %s515
      %p524 = scmp.eq.s32.totalorder %s48, 0
      %p525 = por %p523, %p524
      %p526 = scmp.ne.s32.totalorder %s514, %s515
      %p527 = scmp.eq.s32.totalorder %s49, 1
      %p528 = por %p526, %p527
      %p530 = scmp.ne.s32.totalorder %s515, %s529
      %p531 = scmp.eq.s32.totalorder %s49, 0
      %p532 = por %p530, %p531
      %s534 = sadd.s32 %s533, 1
      %p537 = scmp.eq.s32.totalorder %s43, 1
      %p538 = scmp.ne.s32.totalorder %s533, %s535
      %p539 = scmp.eq.s32.totalorder %s43, 0
      %p540 = por %p538, %p539
      %p541 = scmp.ne.s32.totalorder %s533, %s535
      %p542 = scmp.eq.s32.totalorder %s48, 1
      %p543 = por %p541, %p542
      %p544 = scmp.ne.s32.totalorder %s535, %s536
      %p545 = scmp.eq.s32.totalorder %s48, 0
      %p546 = por %p544, %p545
      %p547 = scmp.ne.s32.totalorder %s535, %s536
      %p548 = scmp.eq.s32.totalorder %s49, 1
      %p549 = por %p547, %p548
      %p551 = scmp.ne.s32.totalorder %s536, %s550
      %p552 = scmp.eq.s32.totalorder %s49, 0
      %p553 = por %p551, %p552
      %s555 = sadd.s32 %s554, 1
      %p558 = scmp.eq.s32.totalorder %s43, 1
      %p559 = scmp.ne.s32.totalorder %s554, %s556
      %p560 = scmp.eq.s32.totalorder %s43, 0
      %p561 = por %p559, %p560
      %p562 = scmp.ne.s32.totalorder %s554, %s556
      %p563 = scmp.eq.s32.totalorder %s48, 1
      %p564 = por %p562, %p563
      %p565 = scmp.ne.s32.totalorder %s556, %s557
      %p566 = scmp.eq.s32.totalorder %s48, 0
      %p567 = por %p565, %p566
      %p568 = scmp.ne.s32.totalorder %s556, %s557
      %p569 = scmp.eq.s32.totalorder %s49, 1
      %p570 = por %p568, %p569
      %p572 = scmp.ne.s32.totalorder %s557, %s571
      %p573 = scmp.eq.s32.totalorder %s49, 0
      %p574 = por %p572, %p573
      %s575 = ssub.s32 %s43, %s50
      %p576 = scmp.eq.s32.totalorder %s575, 0
      %s578 = sadd.s32 %s577, 1
      %s579 = scalar_select %p576, %s577, %s578
      %p582 = pneg %p576
      %p583 = scmp.eq.s32.totalorder %s43, 1
      %p584 = por %p582, %p583
      %p585 = scmp.ne.s32.totalorder %s577, %s580
      %p586 = scmp.eq.s32.totalorder %s43, 0
      %p587 = por %p585, %p586
      %p588 = scmp.ne.s32.totalorder %s577, %s580
      %p589 = scmp.eq.s32.totalorder %s48, 1
      %p590 = por %p588, %p589
      %p591 = scmp.ne.s32.totalorder %s580, %s581
      %p592 = scmp.eq.s32.totalorder %s48, 0
      %p593 = por %p591, %p592
      %p594 = scmp.ne.s32.totalorder %s580, %s581
      %p595 = scmp.eq.s32.totalorder %s49, 1
      %p596 = por %p594, %p595
      %p598 = scmp.ne.s32.totalorder %s581, %s597
      %p599 = scmp.eq.s32.totalorder %s49, 0
      %p600 = por %p598, %p599
      %p601 = scmp.le.s32.totalorder 1, %s43
      %p602 = scmp.lt.s32.totalorder %s43, 3
      %p603 = pnand %p601, %p602
      %p604 = pneg %p603
      // Predicated region
      $region9: #{tpu_custom_call.1} parent=5 // pred_check
        _
      $region10: #{tpu_custom_call.1} parent=5 // pred_check_branch
        %606 = sbr.rel (%p603) target = $region12
      $region11: #{tpu_custom_call.1} parent=5 // pred_region
        %s607 = ssub.s32 %s43, 1
        // Predicated region
        $region13: #{tpu_custom_call.1} parent=11 // pred_check
          %p608 = pneg %p168
        $region14: #{tpu_custom_call.1} parent=11 // pred_check_branch
          %610 = sbr.rel (%p608) target = $region16
        $region15: #{tpu_custom_call.1} parent=11 // pred_region
          _
        $region16: #{tpu_custom_call.1} parent=11 // pred_fallthru
          _
        // Predicated region
        $region17: #{tpu_custom_call.1} parent=11 // pred_check
          %p611 = pneg %p189
        $region18: #{tpu_custom_call.1} parent=11 // pred_check_branch
          %613 = sbr.rel (%p611) target = $region20
        $region19: #{tpu_custom_call.1} parent=11 // pred_region
          _
        $region20: #{tpu_custom_call.1} parent=11 // pred_fallthru
          _
        // Predicated region
        $region21: #{tpu_custom_call.1} parent=11 // pred_check
          %p614 = pneg %p210
        $region22: #{tpu_custom_call.1} parent=11 // pred_check_branch
          %616 = sbr.rel (%p614) target = $region24
        $region23: #{tpu_custom_call.1} parent=11 // pred_region
          _
        $region24: #{tpu_custom_call.1} parent=11 // pred_fallthru
          _
        // Predicated region
        $region25: #{tpu_custom_call.1} parent=11 // pred_check
          %p617 = pneg %p231
        $region26: #{tpu_custom_call.1} parent=11 // pred_check_branch
          %619 = sbr.rel (%p617) target = $region28
        $region27: #{tpu_custom_call.1} parent=11 // pred_region
          _
        $region28: #{tpu_custom_call.1} parent=11 // pred_fallthru
          _
        // Predicated region
        $region29: #{tpu_custom_call.1} parent=11 // pred_check
          %p620 = pneg %p252
        $region30: #{tpu_custom_call.1} parent=11 // pred_check_branch
          %622 = sbr.rel (%p620) target = $region32
        $region31: #{tpu_custom_call.1} parent=11 // pred_region
          _
        $region32: #{tpu_custom_call.1} parent=11 // pred_fallthru
          _
        // Predicated region
        $region33: #{tpu_custom_call.1} parent=11 // pred_check
          %p623 = pneg %p273
        $region34: #{tpu_custom_call.1} parent=11 // pred_check_branch
          %625 = sbr.rel (%p623) target = $region36
        $region35: #{tpu_custom_call.1} parent=11 // pred_region
          _
        $region36: #{tpu_custom_call.1} parent=11 // pred_fallthru
          _
        // Predicated region
        $region37: #{tpu_custom_call.1} parent=11 // pred_check
          %p626 = pneg %p294
        $region38: #{tpu_custom_call.1} parent=11 // pred_check_branch
          %628 = sbr.rel (%p626) target = $region40
        $region39: #{tpu_custom_call.1} parent=11 // pred_region
          _
        $region40: #{tpu_custom_call.1} parent=11 // pred_fallthru
          _
        // Predicated region
        $region41: #{tpu_custom_call.1} parent=11 // pred_check
          %p629 = pneg %p315
        $region42: #{tpu_custom_call.1} parent=11 // pred_check_branch
          %631 = sbr.rel (%p629) target = $region44
        $region43: #{tpu_custom_call.1} parent=11 // pred_region
          _
        $region44: #{tpu_custom_call.1} parent=11 // pred_fallthru
          _
        // Predicated region
        $region45: #{tpu_custom_call.1} parent=11 // pred_check
          %p632 = pneg %p336
        $region46: #{tpu_custom_call.1} parent=11 // pred_check_branch
          %634 = sbr.rel (%p632) target = $region48
        $region47: #{tpu_custom_call.1} parent=11 // pred_region
          %636 = vsyncadd [#allocation9], 0
          %s637 = sshll.u32 %s12, 4
          %s638 = int_to_ptr.hbm [resolvable:$true] %s637
          %s639 = sshll.u32 [#allocation10], 4
          %s640 = int_to_ptr.vmem [resolvable:$true] %s639
          %645 = dma.hbm_to_vmem [thread:$0]  %s638, 512, %s640, [#allocation9], 128, 128, 8
        $region48: #{tpu_custom_call.1} parent=11 // pred_fallthru
          _
        // Predicated region
        $region49: #{tpu_custom_call.1} parent=11 // pred_check
          %p646 = pneg %p357
        $region50: #{tpu_custom_call.1} parent=11 // pred_check_branch
          %648 = sbr.rel (%p646) target = $region52
        $region51: #{tpu_custom_call.1} parent=11 // pred_region
          _
        $region52: #{tpu_custom_call.1} parent=11 // pred_fallthru
          _
        // Predicated region
        $region53: #{tpu_custom_call.1} parent=11 // pred_check
          %p649 = pneg %p378
        $region54: #{tpu_custom_call.1} parent=11 // pred_check_branch
          %651 = sbr.rel (%p649) target = $region56
        $region55: #{tpu_custom_call.1} parent=11 // pred_region
          %653 = vsyncadd [#allocation12], 0
          %s654 = sshll.u32 %s14, 4
          %s655 = int_to_ptr.hbm [resolvable:$true] %s654
          %s656 = sshll.u32 [#allocation11], 4
          %s657 = int_to_ptr.vmem [resolvable:$true] %s656
          %662 = dma.hbm_to_vmem [thread:$0]  %s655, 512, %s657, [#allocation12], 128, 128, 8
        $region56: #{tpu_custom_call.1} parent=11 // pred_fallthru
          _
        // Predicated region
        $region57: #{tpu_custom_call.1} parent=11 // pred_check
          %p663 = pneg %p399
        $region58: #{tpu_custom_call.1} parent=11 // pred_check_branch
          %665 = sbr.rel (%p663) target = $region60
        $region59: #{tpu_custom_call.1} parent=11 // pred_region
          _
        $region60: #{tpu_custom_call.1} parent=11 // pred_fallthru
          _
        // Predicated region
        $region61: #{tpu_custom_call.1} parent=11 // pred_check
          %p666 = pneg %p420
        $region62: #{tpu_custom_call.1} parent=11 // pred_check_branch
          %668 = sbr.rel (%p666) target = $region64
        $region63: #{tpu_custom_call.1} parent=11 // pred_region
          _
        $region64: #{tpu_custom_call.1} parent=11 // pred_fallthru
          _
        // Predicated region
        $region65: #{tpu_custom_call.1} parent=11 // pred_check
          %p669 = pneg %p441
        $region66: #{tpu_custom_call.1} parent=11 // pred_check_branch
          %671 = sbr.rel (%p669) target = $region68
        $region67: #{tpu_custom_call.1} parent=11 // pred_region
          _
        $region68: #{tpu_custom_call.1} parent=11 // pred_fallthru
          _
        // Predicated region
        $region69: #{tpu_custom_call.1} parent=11 // pred_check
          %p672 = pneg %p462
        $region70: #{tpu_custom_call.1} parent=11 // pred_check_branch
          %674 = sbr.rel (%p672) target = $region72
        $region71: #{tpu_custom_call.1} parent=11 // pred_region
          %676 = vsyncadd [#allocation12], 0
          %s677 = sshll.u32 %s18, 4
          %s678 = int_to_ptr.hbm [resolvable:$true] %s677
          %s679 = sshll.u32 [#allocation13], 4
          %s680 = int_to_ptr.vmem [resolvable:$true] %s679
          %685 = dma.hbm_to_vmem [thread:$0]  %s678, 512, %s680, [#allocation12], 128, 128, 8
        $region72: #{tpu_custom_call.1} parent=11 // pred_fallthru
          _
        // Predicated region
        $region73: #{tpu_custom_call.1} parent=11 // pred_check
          %p686 = pneg %p483
        $region74: #{tpu_custom_call.1} parent=11 // pred_check_branch
          %688 = sbr.rel (%p686) target = $region76
        $region75: #{tpu_custom_call.1} parent=11 // pred_region
          _
        $region76: #{tpu_custom_call.1} parent=11 // pred_fallthru
          _
        // Predicated region
        $region77: #{tpu_custom_call.1} parent=11 // pred_check
          %p689 = pneg %p504
        $region78: #{tpu_custom_call.1} parent=11 // pred_check_branch
          %691 = sbr.rel (%p689) target = $region80
        $region79: #{tpu_custom_call.1} parent=11 // pred_region
          _
        $region80: #{tpu_custom_call.1} parent=11 // pred_fallthru
          _
        // Predicated region
        $region81: #{tpu_custom_call.1} parent=11 // pred_check
          %p692 = pneg %p525
        $region82: #{tpu_custom_call.1} parent=11 // pred_check_branch
          %694 = sbr.rel (%p692) target = $region84
        $region83: #{tpu_custom_call.1} parent=11 // pred_region
          _
        $region84: #{tpu_custom_call.1} parent=11 // pred_fallthru
          _
        // Predicated region
        $region85: #{tpu_custom_call.1} parent=11 // pred_check
          %p695 = pneg %p546
        $region86: #{tpu_custom_call.1} parent=11 // pred_check_branch
          %697 = sbr.rel (%p695) target = $region88
        $region87: #{tpu_custom_call.1} parent=11 // pred_region
          _
        $region88: #{tpu_custom_call.1} parent=11 // pred_fallthru
          _
        // Predicated region
        $region89: #{tpu_custom_call.1} parent=11 // pred_check
          %p698 = pneg %p567
        $region90: #{tpu_custom_call.1} parent=11 // pred_check_branch
          %700 = sbr.rel (%p698) target = $region92
        $region91: #{tpu_custom_call.1} parent=11 // pred_region
          _
        $region92: #{tpu_custom_call.1} parent=11 // pred_fallthru
          _
      $region12: #{tpu_custom_call.1} parent=5 // pred_fallthru
        _
      %p701 = scmp.lt.s32.totalorder %s43, 2
      // Predicated region
      $region93: #{tpu_custom_call.1} parent=5 // pred_check
        %p702 = pneg %p701
      $region94: #{tpu_custom_call.1} parent=5 // pred_check_branch
        %704 = sbr.rel (%p702) target = $region96
      $region95: #{tpu_custom_call.1} parent=5 // pred_region
        // Predicated region
        $region97: #{tpu_custom_call.1} parent=95 // pred_check
          %p705 = pneg %p63
        $region98: #{tpu_custom_call.1} parent=95 // pred_check_branch
          %707 = sbr.rel (%p705) target = $region100
        $region99: #{tpu_custom_call.1} parent=95 // pred_region
          %s708 = sand.u32 %s53, 1
          %s709 = scalar_lea.sflag [#allocation3], %s708
          %s710 = sand.u32 %s53, 1
          %s711 = smul.addr %s710, 8
          %s712 = scalar_lea.vmem [#allocation2], %s711
          %714 = vsyncadd %s709, 0
          %s715 = smul.addr %s43, 8
          %s716 = scalar_lea.hbm %s0, %s715
          %s718 = sshll.u32 %s716, 4
          %s719 = int_to_ptr.hbm [resolvable:$true] %s718
          %s720 = sshll.u32 %s712, 4
          %s721 = int_to_ptr.vmem [resolvable:$true] %s720
          %723 = dma.hbm_to_vmem [thread:$0]  %s719, 128, %s721, %s709
        $region100: #{tpu_custom_call.1} parent=95 // pred_fallthru
          _
        // Predicated region
        $region101: #{tpu_custom_call.1} parent=95 // pred_check
          %p724 = pneg %p89
        $region102: #{tpu_custom_call.1} parent=95 // pred_check_branch
          %726 = sbr.rel (%p724) target = $region104
        $region103: #{tpu_custom_call.1} parent=95 // pred_region
          %s727 = sand.u32 %s43, 1
          %s728 = scalar_lea.sflag [#allocation6], %s727
          %s729 = sand.u32 %s79, 1
          %s730 = smul.addr %s729, 8
          %s731 = scalar_lea.vmem [#allocation5], %s730
          %733 = vsyncadd %s728, 0
          %s734 = smul.addr %s43, 8
          %s735 = scalar_lea.hbm %s1, %s734
          %s737 = sshll.u32 %s735, 4
          %s738 = int_to_ptr.hbm [resolvable:$true] %s737
          %s739 = sshll.u32 %s731, 4
          %s740 = int_to_ptr.vmem [resolvable:$true] %s739
          %742 = dma.hbm_to_vmem [thread:$0]  %s738, 128, %s740, %s728
        $region104: #{tpu_custom_call.1} parent=95 // pred_fallthru
          _
        // Predicated region
        $region105: #{tpu_custom_call.1} parent=95 // pred_check
          %p743 = pneg %p115
        $region106: #{tpu_custom_call.1} parent=95 // pred_check_branch
          %745 = sbr.rel (%p743) target = $region108
        $region107: #{tpu_custom_call.1} parent=95 // pred_region
          %s746 = sand.u32 %s43, 1
          %s747 = scalar_lea.sflag [#allocation6], %s746
          %s748 = sand.u32 %s105, 1
          %s749 = smul.addr %s748, 8
          %s750 = scalar_lea.vmem [#allocation7], %s749
          %752 = vsyncadd %s747, 0
          %s753 = smul.addr %s43, 8
          %s754 = scalar_lea.hbm %s2, %s753
          %s756 = sshll.u32 %s754, 4
          %s757 = int_to_ptr.hbm [resolvable:$true] %s756
          %s758 = sshll.u32 %s750, 4
          %s759 = int_to_ptr.vmem [resolvable:$true] %s758
          %761 = dma.hbm_to_vmem [thread:$0]  %s757, 128, %s759, %s747
        $region108: #{tpu_custom_call.1} parent=95 // pred_fallthru
          _
        // Predicated region
        $region109: #{tpu_custom_call.1} parent=95 // pred_check
          %p762 = pneg %p141
        $region110: #{tpu_custom_call.1} parent=95 // pred_check_branch
          %764 = sbr.rel (%p762) target = $region112
        $region111: #{tpu_custom_call.1} parent=95 // pred_region
          %s765 = sand.u32 %s43, 1
          %s766 = scalar_lea.sflag [#allocation9], %s765
          %s767 = sand.u32 %s131, 1
          %s768 = smul.addr %s767, 8
          %s769 = scalar_lea.vmem [#allocation8], %s768
          %771 = vsyncadd %s766, 0
          %s772 = smul.addr %s43, 8
          %s773 = scalar_lea.hbm %s3, %s772
          %s775 = sshll.u32 %s773, 4
          %s776 = int_to_ptr.hbm [resolvable:$true] %s775
          %s777 = sshll.u32 %s769, 4
          %s778 = int_to_ptr.vmem [resolvable:$true] %s777
          %780 = dma.hbm_to_vmem [thread:$0]  %s776, 128, %s778, %s766
        $region112: #{tpu_custom_call.1} parent=95 // pred_fallthru
          _
      $region96: #{tpu_custom_call.1} parent=5 // pred_fallthru
        _
      %p781 = scmp.le.s32.totalorder 1, %s43
      %p782 = scmp.lt.s32.totalorder %s43, 3
      %p783 = pnand %p781, %p782
      %p784 = pneg %p783
      // Predicated region
      $region113: #{tpu_custom_call.1} parent=5 // pred_check
        _
      $region114: #{tpu_custom_call.1} parent=5 // pred_check_branch
        %786 = sbr.rel (%p783) target = $region116
      $region115: #{tpu_custom_call.1} parent=5 // pred_region
        %s787 = ssub.s32 %s43, 1
        %s788 = sand.u32 %s56, 1
        %s789 = scalar_lea.sflag [#allocation3], %s788
        %s790 = sand.u32 %s56, 1
        %s791 = smul.addr %s790, 8
        %s792 = scalar_lea.vmem [#allocation2], %s791
        // Predicated region
        $region117: #{tpu_custom_call.1} parent=115 // pred_check
          %p793 = pneg %p69
        $region118: #{tpu_custom_call.1} parent=115 // pred_check_branch
          %795 = sbr.rel (%p793) target = $region120
        $region119: #{tpu_custom_call.1} parent=115 // pred_region
          %797 = dma.done %s789, 128
        $region120: #{tpu_custom_call.1} parent=115 // pred_fallthru
          _
        %s798 = sand.u32 %s48, 1
        %s799 = scalar_lea.sflag [#allocation6], %s798
        %s800 = sand.u32 %s82, 1
        %s801 = smul.addr %s800, 8
        %s802 = scalar_lea.vmem [#allocation5], %s801
        // Predicated region
        $region121: #{tpu_custom_call.1} parent=115 // pred_check
          %p803 = pneg %p95
        $region122: #{tpu_custom_call.1} parent=115 // pred_check_branch
          %805 = sbr.rel (%p803) target = $region124
        $region123: #{tpu_custom_call.1} parent=115 // pred_region
          %807 = dma.done %s799, 128
        $region124: #{tpu_custom_call.1} parent=115 // pred_fallthru
          _
        %s808 = sand.u32 %s48, 1
        %s809 = scalar_lea.sflag [#allocation6], %s808
        %s810 = sand.u32 %s108, 1
        %s811 = smul.addr %s810, 8
        %s812 = scalar_lea.vmem [#allocation7], %s811
        // Predicated region
        $region125: #{tpu_custom_call.1} parent=115 // pred_check
          %p813 = pneg %p121
        $region126: #{tpu_custom_call.1} parent=115 // pred_check_branch
          %815 = sbr.rel (%p813) target = $region128
        $region127: #{tpu_custom_call.1} parent=115 // pred_region
          %817 = dma.done %s809, 128
        $region128: #{tpu_custom_call.1} parent=115 // pred_fallthru
          _
        %s818 = sand.u32 %s48, 1
        %s819 = scalar_lea.sflag [#allocation9], %s818
        %s820 = sand.u32 %s134, 1
        %s821 = smul.addr %s820, 8
        %s822 = scalar_lea.vmem [#allocation8], %s821
        // Predicated region
        $region129: #{tpu_custom_call.1} parent=115 // pred_check
          %p823 = pneg %p147
        $region130: #{tpu_custom_call.1} parent=115 // pred_check_branch
          %825 = sbr.rel (%p823) target = $region132
        $region131: #{tpu_custom_call.1} parent=115 // pred_region
          %827 = dma.done %s819, 128
        $region132: #{tpu_custom_call.1} parent=115 // pred_fallthru
          _
        // Predicated region
        $region133: #{tpu_custom_call.1} parent=115 // pred_check
          %p828 = pneg %p336
        $region134: #{tpu_custom_call.1} parent=115 // pred_check_branch
          %830 = sbr.rel (%p828) target = $region136
        $region135: #{tpu_custom_call.1} parent=115 // pred_region
          %832 = dma.done [#allocation9], 512
        $region136: #{tpu_custom_call.1} parent=115 // pred_fallthru
          _
        // Predicated region
        $region137: #{tpu_custom_call.1} parent=115 // pred_check
          %p833 = pneg %p378
        $region138: #{tpu_custom_call.1} parent=115 // pred_check_branch
          %835 = sbr.rel (%p833) target = $region140
        $region139: #{tpu_custom_call.1} parent=115 // pred_region
          %837 = dma.done [#allocation12], 512
        $region140: #{tpu_custom_call.1} parent=115 // pred_fallthru
          _
        // Predicated region
        $region141: #{tpu_custom_call.1} parent=115 // pred_check
          %p838 = pneg %p462
        $region142: #{tpu_custom_call.1} parent=115 // pred_check_branch
          %840 = sbr.rel (%p838) target = $region144
        $region143: #{tpu_custom_call.1} parent=115 // pred_region
          %842 = dma.done [#allocation12], 512
        $region144: #{tpu_custom_call.1} parent=115 // pred_fallthru
          _
        %s843 = sand.u32 %s56, 1
        %s844 = scalar_lea.sflag [#allocation3], %s843
        %s845 = sand.u32 %s56, 1
        %s846 = smul.addr %s845, 8
        %s847 = scalar_lea.vmem [#allocation2], %s846
        %p848 = pneg %p69
        %p849 = pneg %p66
        %s850 = sand.u32 %s48, 1
        %s851 = scalar_lea.sflag [#allocation6], %s850
        %s852 = sand.u32 %s82, 1
        %s853 = smul.addr %s852, 8
        %s854 = scalar_lea.vmem [#allocation5], %s853
        %p855 = pneg %p95
        %p856 = pneg %p92
        %s857 = sand.u32 %s48, 1
        %s858 = scalar_lea.sflag [#allocation6], %s857
        %s859 = sand.u32 %s108, 1
        %s860 = smul.addr %s859, 8
        %s861 = scalar_lea.vmem [#allocation7], %s860
        %p862 = pneg %p121
        %p863 = pneg %p118
        %s864 = sand.u32 %s48, 1
        %s865 = scalar_lea.sflag [#allocation9], %s864
        %s866 = sand.u32 %s134, 1
        %s867 = smul.addr %s866, 8
        %s868 = scalar_lea.vmem [#allocation8], %s867
        %p869 = pneg %p147
        %p870 = pneg %p144
        %p871 = pneg %p168
        %p872 = pneg %p165
        %p873 = pneg %p189
        %p874 = pneg %p186
        %p875 = pneg %p210
        %p876 = pneg %p207
        %p877 = pneg %p231
        %p878 = pneg %p228
        %p879 = pneg %p252
        %p880 = pneg %p249
        %p881 = pneg %p273
        %p882 = pneg %p270
        %p883 = pneg %p294
        %p884 = pneg %p291
        %p885 = pneg %p315
        %p886 = pneg %p312
        %p887 = pneg %p336
        %p888 = pneg %p333
        %p889 = pneg %p357
        %p890 = pneg %p354
        %p891 = pneg %p378
        %p892 = pneg %p375
        %p893 = pneg %p399
        %p894 = pneg %p396
        %p895 = pneg %p420
        %p896 = pneg %p417
        %p897 = pneg %p441
        %p898 = pneg %p438
        %p899 = pneg %p462
        %p900 = pneg %p459
        %p901 = pneg %p483
        %p902 = pneg %p480
        %p903 = pneg %p504
        %p904 = pneg %p501
        %p905 = pneg %p525
        %p906 = pneg %p522
        %p907 = pneg %p546
        %p908 = pneg %p543
        %p909 = pneg %p567
        %p910 = pneg %p564
        %p911 = pneg %p593
        %p912 = pneg %p590
        %s913 = sand.u32 %s580, 1
        %s914 = scalar_lea.sflag [#allocation4], %s913
        %s915 = sand.u32 %s580, 1
        %s916 = smul.addr %s915, 8
        %s917 = scalar_lea.vmem [#allocation14], %s916
        %v918 = vld [vmem:[%s792] sm:$0xff]
        %v919 = vld [vmem:[%s802] sm:$0xff]
        %v920 = vld [vmem:[%s4] sm:$0xff]
        %v921 = vld [vmem:[%s4 + $0x8] sm:$0xff]
        %v922 = vld [vmem:[%s4 + $0x10] sm:$0xff]
        %v923 = vld [vmem:[%s4 + $0x18] sm:$0xff]
        %v924 = vld [vmem:[%s5] sm:$0x1]
        %v926 = vperm.slane %v924, 0
        %vm928 = vcmask 261120
        %v930 = vsel %vm928, %v918, 0
        %932 = vmatpush.msra.mxu0 0.0
        %933 = vmatpush.msra.mxu0 0.0
        %934 = vmatpush.msra.mxu0 0.0
        %935 = vmatpush.msra.mxu0 0.0
        %936 = vmatpush.msra.mxu0 0.0
        %937 = vmatpush.msra.mxu0 0.0
        %938 = vmatpush.msra.mxu0 0.0
        %939 = vmatpush.msra.mxu0 0.0
        %940 = vmatpush.msra.mxu0 0.0
        %941 = vmatpush.msra.mxu0 0.0
        %942 = vmatpush.msra.mxu0 0.0
        %943 = vmatpush.msra.mxu0 0.0
        %944 = vmatpush.msra.mxu0 %v923
        %945 = vmatpush.msra.mxu0 %v922
        %946 = vmatpush.msra.mxu0 %v921
        %947 = vmatpush.msra.mxu0 %v920
        %948 = vmatmul.f32.gmra.mxu0 %v930
        %v949 = vpop.f32.mrf.mxu0
        %v950 = vadd.f32 %v926, %v949
        %951 = vdwg.mxu0
        %v952 = vld [vmem:[%s812] sm:$0xff]
        %954 = vrot.lane.b32.xlu0 %v950, 96
        %v955 = vpop.permute.xlu0 %954
        %vm956 = vcmask 64512
        %v957 = vsel %vm956, %v950, 0
        %v959 = vsel %vm956, %v955, 0
        %961 = vmatpush.xpose.msra.mxu0 0.0
        %962 = vmatpush.xpose.msra.mxu0 0.0
        %963 = vmatpush.xpose.msra.mxu0 0.0
        %964 = vmatpush.xpose.msra.mxu0 0.0
        %965 = vmatpush.xpose.msra.mxu0 0.0
        %966 = vmatpush.xpose.msra.mxu0 0.0
        %967 = vmatpush.xpose.msra.mxu0 0.0
        %968 = vmatpush.xpose.msra.mxu0 0.0
        %969 = vmatpush.xpose.msra.mxu0 0.0
        %970 = vmatpush.xpose.msra.mxu0 0.0
        %971 = vmatpush.xpose.msra.mxu0 0.0
        %972 = vmatpush.xpose.msra.mxu0 0.0
        %973 = vmatpush.xpose.msra.mxu0 0.0
        %974 = vmatpush.xpose.msra.mxu0 0.0
        %975 = vmatpush.xpose.msra.mxu0 0.0
        %976 = vmatpush.xpose.msra.mxu0 %v959
        %977 = vmatmul.f32.gmra.mxu0 %v957
        %v978 = vpop.f32.mrf.mxu0
        %v979 = vadd.f32 0.0, %v978
        %980 = vdwg.mxu0
        %v981 = vmul.f32 %v979, 0.35355338
        %v982 = vadd.f32 %v981, %v952
        %v983 = vsel %vm956, %v982, -inf
        %984 = vmax.xlane.f32.xlu0 %v983
        %v985 = vpop.xlane.xlu0 %984
        %v986 = vsub.f32 %v982, %v985
        %v987 = vmul.f32 %v986, 1.442695
        %v988 = vpow.pop %v987
        %v989 = vsel %vm956, %v988, 0.0
        %990 = vadd.xlane.f32.xlu0 %v989
        %v991 = vpop.xlane.xlu0 %990
        %v992 = vrcp.pop %v991
        %v993 = vmul.f32 %v988, %v992
        %994 = vrot.lane.b32.xlu0 %v950, 64
        %v995 = vpop.permute.xlu0 %994
        %v998 = vsel %vm956, %v993, 0
        %1000 = vmatpush.msra.mxu0 0.0
        %1001 = vmatpush.msra.mxu0 0.0
        %1002 = vmatpush.msra.mxu0 0.0
        %1003 = vmatpush.msra.mxu0 0.0
        %1004 = vmatpush.msra.mxu0 0.0
        %1005 = vmatpush.msra.mxu0 0.0
        %1006 = vmatpush.msra.mxu0 0.0
        %1007 = vmatpush.msra.mxu0 0.0
        %1008 = vmatpush.msra.mxu0 0.0
        %1009 = vmatpush.msra.mxu0 0.0
        %1010 = vmatpush.msra.mxu0 0.0
        %1011 = vmatpush.msra.mxu0 0.0
        %1012 = vmatpush.msra.mxu0 0.0
        %1013 = vmatpush.msra.mxu0 0.0
        %1014 = vmatpush.msra.mxu0 0.0
        %1015 = vmatpush.msra.mxu0 %v995
        %1016 = vmatmul.f32.gmra.mxu0 %v998
        %v1017 = vpop.f32.mrf.mxu0
        %v1018 = vadd.f32 0.0, %v1017
        %1019 = vdwg.mxu0
        %1020 = vrot.lane.b32.xlu0 %v950, 120
        %v1021 = vpop.permute.xlu0 %1020
        %1022 = vrot.lane.b32.xlu0 %v950, 88
        %v1023 = vpop.permute.xlu0 %1022
        %v1024 = vsel %vm956, %v1021, 0
        %v1026 = vsel %vm956, %v1023, 0
        %1028 = vmatpush.xpose.msra.mxu0 0.0
        %1029 = vmatpush.xpose.msra.mxu0 0.0
        %1030 = vmatpush.xpose.msra.mxu0 0.0
        %1031 = vmatpush.xpose.msra.mxu0 0.0
        %1032 = vmatpush.xpose.msra.mxu0 0.0
        %1033 = vmatpush.xpose.msra.mxu0 0.0
        %1034 = vmatpush.xpose.msra.mxu0 0.0
        %1035 = vmatpush.xpose.msra.mxu0 0.0
        %1036 = vmatpush.xpose.msra.mxu0 0.0
        %1037 = vmatpush.xpose.msra.mxu0 0.0
        %1038 = vmatpush.xpose.msra.mxu0 0.0
        %1039 = vmatpush.xpose.msra.mxu0 0.0
        %1040 = vmatpush.xpose.msra.mxu0 0.0
        %1041 = vmatpush.xpose.msra.mxu0 0.0
        %1042 = vmatpush.xpose.msra.mxu0 0.0
        %1043 = vmatpush.xpose.msra.mxu0 %v1026
        %1044 = vmatmul.f32.gmra.mxu0 %v1024
        %v1045 = vpop.f32.mrf.mxu0
        %v1046 = vadd.f32 0.0, %v1045
        %1047 = vdwg.mxu0
        %v1048 = vmul.f32 %v1046, 0.35355338
        %v1049 = vadd.f32 %v1048, %v952
        %v1050 = vsel %vm956, %v1049, -inf
        %1051 = vmax.xlane.f32.xlu0 %v1050
        %v1052 = vpop.xlane.xlu0 %1051
        %v1053 = vsub.f32 %v1049, %v1052
        %v1054 = vmul.f32 %v1053, 1.442695
        %v1055 = vpow.pop %v1054
        %v1056 = vsel %vm956, %v1055, 0.0
        %1057 = vadd.xlane.f32.xlu0 %v1056
        %v1058 = vpop.xlane.xlu0 %1057
        %v1059 = vrcp.pop %v1058
        %v1060 = vmul.f32 %v1055, %v1059
        %1061 = vrot.lane.b32.xlu0 %v950, 56
        %v1062 = vpop.permute.xlu0 %1061
        %v1065 = vsel %vm956, %v1060, 0
        %1067 = vmatpush.msra.mxu0 0.0
        %1068 = vmatpush.msra.mxu0 0.0
        %1069 = vmatpush.msra.mxu0 0.0
        %1070 = vmatpush.msra.mxu0 0.0
        %1071 = vmatpush.msra.mxu0 0.0
        %1072 = vmatpush.msra.mxu0 0.0
        %1073 = vmatpush.msra.mxu0 0.0
        %1074 = vmatpush.msra.mxu0 0.0
        %1075 = vmatpush.msra.mxu0 0.0
        %1076 = vmatpush.msra.mxu0 0.0
        %1077 = vmatpush.msra.mxu0 0.0
        %1078 = vmatpush.msra.mxu0 0.0
        %1079 = vmatpush.msra.mxu0 0.0
        %1080 = vmatpush.msra.mxu0 0.0
        %1081 = vmatpush.msra.mxu0 0.0
        %1082 = vmatpush.msra.mxu0 %v1062
        %1083 = vmatmul.f32.gmra.mxu0 %v1065
        %v1084 = vpop.f32.mrf.mxu0
        %v1085 = vadd.f32 0.0, %v1084
        %1086 = vdwg.mxu0
        %1087 = vrot.lane.b32.xlu0 %v950, 112
        %v1088 = vpop.permute.xlu0 %1087
        %1089 = vrot.lane.b32.xlu0 %v950, 80
        %v1090 = vpop.permute.xlu0 %1089
        %v1091 = vsel %vm956, %v1088, 0
        %v1093 = vsel %vm956, %v1090, 0
        %1095 = vmatpush.xpose.msra.mxu0 0.0
        %1096 = vmatpush.xpose.msra.mxu0 0.0
        %1097 = vmatpush.xpose.msra.mxu0 0.0
        %1098 = vmatpush.xpose.msra.mxu0 0.0
        %1099 = vmatpush.xpose.msra.mxu0 0.0
        %1100 = vmatpush.xpose.msra.mxu0 0.0
        %1101 = vmatpush.xpose.msra.mxu0 0.0
        %1102 = vmatpush.xpose.msra.mxu0 0.0
        %1103 = vmatpush.xpose.msra.mxu0 0.0
        %1104 = vmatpush.xpose.msra.mxu0 0.0
        %1105 = vmatpush.xpose.msra.mxu0 0.0
        %1106 = vmatpush.xpose.msra.mxu0 0.0
        %1107 = vmatpush.xpose.msra.mxu0 0.0
        %1108 = vmatpush.xpose.msra.mxu0 0.0
        %1109 = vmatpush.xpose.msra.mxu0 0.0
        %1110 = vmatpush.xpose.msra.mxu0 %v1093
        %1111 = vmatmul.f32.gmra.mxu0 %v1091
        %v1112 = vpop.f32.mrf.mxu0
        %v1113 = vadd.f32 0.0, %v1112
        %1114 = vdwg.mxu0
        %v1115 = vmul.f32 %v1113, 0.35355338
        %v1116 = vadd.f32 %v1115, %v952
        %v1117 = vsel %vm956, %v1116, -inf
        %1118 = vmax.xlane.f32.xlu0 %v1117
        %v1119 = vpop.xlane.xlu0 %1118
        %v1120 = vsub.f32 %v1116, %v1119
        %v1121 = vmul.f32 %v1120, 1.442695
        %v1122 = vpow.pop %v1121
        %v1123 = vsel %vm956, %v1122, 0.0
        %1124 = vadd.xlane.f32.xlu0 %v1123
        %v1125 = vpop.xlane.xlu0 %1124
        %v1126 = vrcp.pop %v1125
        %v1127 = vmul.f32 %v1122, %v1126
        %1128 = vrot.lane.b32.xlu0 %v950, 48
        %v1129 = vpop.permute.xlu0 %1128
        %v1132 = vsel %vm956, %v1127, 0
        %1134 = vmatpush.msra.mxu0 0.0
        %1135 = vmatpush.msra.mxu0 0.0
        %1136 = vmatpush.msra.mxu0 0.0
        %1137 = vmatpush.msra.mxu0 0.0
        %1138 = vmatpush.msra.mxu0 0.0
        %1139 = vmatpush.msra.mxu0 0.0
        %1140 = vmatpush.msra.mxu0 0.0
        %1141 = vmatpush.msra.mxu0 0.0
        %1142 = vmatpush.msra.mxu0 0.0
        %1143 = vmatpush.msra.mxu0 0.0
        %1144 = vmatpush.msra.mxu0 0.0
        %1145 = vmatpush.msra.mxu0 0.0
        %1146 = vmatpush.msra.mxu0 0.0
        %1147 = vmatpush.msra.mxu0 0.0
        %1148 = vmatpush.msra.mxu0 0.0
        %1149 = vmatpush.msra.mxu0 %v1129
        %1150 = vmatmul.f32.gmra.mxu0 %v1132
        %v1151 = vpop.f32.mrf.mxu0
        %v1152 = vadd.f32 0.0, %v1151
        %1153 = vdwg.mxu0
        %1154 = vrot.lane.b32.xlu0 %v950, 104
        %v1155 = vpop.permute.xlu0 %1154
        %1156 = vrot.lane.b32.xlu0 %v950, 72
        %v1157 = vpop.permute.xlu0 %1156
        %v1158 = vsel %vm956, %v1155, 0
        %v1160 = vsel %vm956, %v1157, 0
        %1162 = vmatpush.xpose.msra.mxu0 0.0
        %1163 = vmatpush.xpose.msra.mxu0 0.0
        %1164 = vmatpush.xpose.msra.mxu0 0.0
        %1165 = vmatpush.xpose.msra.mxu0 0.0
        %1166 = vmatpush.xpose.msra.mxu0 0.0
        %1167 = vmatpush.xpose.msra.mxu0 0.0
        %1168 = vmatpush.xpose.msra.mxu0 0.0
        %1169 = vmatpush.xpose.msra.mxu0 0.0
        %1170 = vmatpush.xpose.msra.mxu0 0.0
        %1171 = vmatpush.xpose.msra.mxu0 0.0
        %1172 = vmatpush.xpose.msra.mxu0 0.0
        %1173 = vmatpush.xpose.msra.mxu0 0.0
        %1174 = vmatpush.xpose.msra.mxu0 0.0
        %1175 = vmatpush.xpose.msra.mxu0 0.0
        %1176 = vmatpush.xpose.msra.mxu0 0.0
        %1177 = vmatpush.xpose.msra.mxu0 %v1160
        %1178 = vmatmul.f32.gmra.mxu0 %v1158
        %v1179 = vpop.f32.mrf.mxu0
        %v1180 = vadd.f32 0.0, %v1179
        %1181 = vdwg.mxu0
        %v1182 = vmul.f32 %v1180, 0.35355338
        %v1183 = vadd.f32 %v1182, %v952
        %v1184 = vsel %vm956, %v1183, -inf
        %1185 = vmax.xlane.f32.xlu0 %v1184
        %v1186 = vpop.xlane.xlu0 %1185
        %v1187 = vsub.f32 %v1183, %v1186
        %v1188 = vmul.f32 %v1187, 1.442695
        %v1189 = vpow.pop %v1188
        %v1190 = vsel %vm956, %v1189, 0.0
        %1191 = vadd.xlane.f32.xlu0 %v1190
        %v1192 = vpop.xlane.xlu0 %1191
        %v1193 = vrcp.pop %v1192
        %v1194 = vmul.f32 %v1189, %v1193
        %1195 = vrot.lane.b32.xlu0 %v950, 40
        %v1196 = vpop.permute.xlu0 %1195
        %v1199 = vsel %vm956, %v1194, 0
        %1201 = vmatpush.msra.mxu0 0.0
        %1202 = vmatpush.msra.mxu0 0.0
        %1203 = vmatpush.msra.mxu0 0.0
        %1204 = vmatpush.msra.mxu0 0.0
        %1205 = vmatpush.msra.mxu0 0.0
        %1206 = vmatpush.msra.mxu0 0.0
        %1207 = vmatpush.msra.mxu0 0.0
        %1208 = vmatpush.msra.mxu0 0.0
        %1209 = vmatpush.msra.mxu0 0.0
        %1210 = vmatpush.msra.mxu0 0.0
        %1211 = vmatpush.msra.mxu0 0.0
        %1212 = vmatpush.msra.mxu0 0.0
        %1213 = vmatpush.msra.mxu0 0.0
        %1214 = vmatpush.msra.mxu0 0.0
        %1215 = vmatpush.msra.mxu0 0.0
        %1216 = vmatpush.msra.mxu0 %v1196
        %1217 = vmatmul.f32.gmra.mxu0 %v1199
        %v1218 = vpop.f32.mrf.mxu0
        %v1219 = vadd.f32 0.0, %v1218
        %1220 = vdwg.mxu0
        %1222 = vrot.lane.b32.xlu0 %v1085, 8
        %v1223 = vpop.permute.xlu0 %1222
        %1226 = vrot.lane.b32.xlu0 %v1152, 16
        %v1227 = vpop.permute.xlu0 %1226
        %1230 = vrot.lane.b32.xlu0 %v1219, 24
        %v1231 = vpop.permute.xlu0 %1230
        %v1233 = vsel %vm956, %v1018, %v1223
        %vm1234 = vcmask 130048
        %v1235 = vsel %vm1234, %v1233, %v1227
        %vm1236 = vcmask 195584
        %v1237 = vsel %vm1236, %v1235, %v1231
        %v1238 = vld [vmem:[%s6] sm:$0xff]
        %v1239 = vld [vmem:[%s6 + $0x8] sm:$0xff]
        %v1240 = vld [vmem:[%s6 + $0x10] sm:$0xff]
        %v1241 = vld [vmem:[%s6 + $0x18] sm:$0xff]
        %v1242 = vld [vmem:[%s7] sm:$0x1]
        %v1244 = vperm.slane %v1242, 0
        %v1247 = vsel %vm928, %v1237, 0
        %1249 = vmatpush.msra.mxu0 0.0
        %1250 = vmatpush.msra.mxu0 0.0
        %1251 = vmatpush.msra.mxu0 0.0
        %1252 = vmatpush.msra.mxu0 0.0
        %1253 = vmatpush.msra.mxu0 0.0
        %1254 = vmatpush.msra.mxu0 0.0
        %1255 = vmatpush.msra.mxu0 0.0
        %1256 = vmatpush.msra.mxu0 0.0
        %1257 = vmatpush.msra.mxu0 0.0
        %1258 = vmatpush.msra.mxu0 0.0
        %1259 = vmatpush.msra.mxu0 0.0
        %1260 = vmatpush.msra.mxu0 0.0
        %1261 = vmatpush.msra.mxu0 %v1241
        %1262 = vmatpush.msra.mxu0 %v1240
        %1263 = vmatpush.msra.mxu0 %v1239
        %1264 = vmatpush.msra.mxu0 %v1238
        %1265 = vmatmul.f32.gmra.mxu0 %v1247
        %v1266 = vpop.f32.mrf.mxu0
        %v1267 = vadd.f32 %v1244, %v1266
        %1268 = vdwg.mxu0
        %v1269 = vadd.f32 %v918, %v1267
        %v1270 = vld [vmem:[%s8] sm:$0x1]
        %v1271 = vld [vmem:[%s9] sm:$0x1]
        %v1272 = vsel %vm928, %v1269, 0.0
        %1273 = vadd.xlane.f32.xlu0 %v1272
        %v1274 = vpop.xlane.xlu0 %1273
        %v1275 = vrcp.pop 32.0
        %v1276 = vmul.f32 32.0, %v1275
        %v1277 = vsub.f32 1.0, %v1276
        %v1278 = vmul.f32 %v1275, %v1277
        %v1279 = vadd.f32 %v1275, %v1278
        %vm1280 = vweird.f32 %v1275
        %v1281 = vsel %vm1280, %v1275, %v1279
        %v1282 = vmul.f32 %v1274, %v1281
        %v1283 = vsub.f32 %v1269, %v1282
        %v1284 = vmul.f32 %v1283, %v1283
        %v1285 = vsel %vm928, %v1284, 0.0
        %1286 = vadd.xlane.f32.xlu0 %v1285
        %v1287 = vpop.xlane.xlu0 %1286
        %v1288 = vmul.f32 %v1287, %v1281
        %v1289 = vadd.f32 %v1288, 1e-05
        %v1290 = vrsqrt.pop %v1289
        %v1291 = vmul.f32 %v1290, %v1289
        %v1292 = vmul.f32 %v1291, %v1290
        %v1293 = vmul.f32 0.5, %v1292
        %v1294 = vsub.f32 1.5, %v1293
        %v1295 = vmul.f32 %v1290, %v1294
        %vm1296 = vweird.f32 %v1289
        %vm1297 = vweird.f32 %v1290
        %vm1298 = vmor %vm1296, %vm1297
        %v1299 = vsel %vm1298, %v1290, %v1295
        %v1300 = vmul.f32 %v1283, %v1299
        %v1302 = vperm.slane %v1270, 0
        %v1304 = vmul.f32 %v1300, %v1302
        %v1306 = vperm.slane %v1271, 0
        %v1308 = vadd.f32 %v1304, %v1306
        %v1309 = vld [vmem:[%s10] sm:$0xff]
        %v1310 = vld [vmem:[%s10 + $0x8] sm:$0xff]
        %v1311 = vld [vmem:[%s10 + $0x10] sm:$0xff]
        %v1312 = vld [vmem:[%s10 + $0x18] sm:$0xff]
        %v1313 = vld [vmem:[%s11] sm:$0x1]
        %v1315 = vperm.slane %v1313, 0
        %v1318 = vsel %vm928, %v1308, 0
        %1320 = vmatpush.msra.mxu0 0.0
        %1321 = vmatpush.msra.mxu0 0.0
        %1322 = vmatpush.msra.mxu0 0.0
        %1323 = vmatpush.msra.mxu0 0.0
        %1324 = vmatpush.msra.mxu0 0.0
        %1325 = vmatpush.msra.mxu0 0.0
        %1326 = vmatpush.msra.mxu0 0.0
        %1327 = vmatpush.msra.mxu0 0.0
        %1328 = vmatpush.msra.mxu0 0.0
        %1329 = vmatpush.msra.mxu0 0.0
        %1330 = vmatpush.msra.mxu0 0.0
        %1331 = vmatpush.msra.mxu0 0.0
        %1332 = vmatpush.msra.mxu0 %v1312
        %1333 = vmatpush.msra.mxu0 %v1311
        %1334 = vmatpush.msra.mxu0 %v1310
        %1335 = vmatpush.msra.mxu0 %v1309
        %1336 = vmatmul.f32.gmra.mxu0 %v1318
        %v1337 = vpop.f32.mrf.mxu0
        %v1338 = vadd.f32 %v1315, %v1337
        %1339 = vdwg.mxu0
        %v1340 = vld [vmem:[#allocation10] sm:$0xff]
        %v1341 = vld [vmem:[#allocation10 + $0x8] sm:$0xff]
        %v1342 = vld [vmem:[#allocation10 + $0x10] sm:$0xff]
        %v1343 = vld [vmem:[#allocation10 + $0x18] sm:$0xff]
        %v1344 = vld [vmem:[%s13] sm:$0x1]
        %v1346 = vperm.slane %v1344, 0
        %v1349 = vsel %vm928, %v919, 0
        %1351 = vmatpush.msra.mxu0 0.0
        %1352 = vmatpush.msra.mxu0 0.0
        %1353 = vmatpush.msra.mxu0 0.0
        %1354 = vmatpush.msra.mxu0 0.0
        %1355 = vmatpush.msra.mxu0 0.0
        %1356 = vmatpush.msra.mxu0 0.0
        %1357 = vmatpush.msra.mxu0 0.0
        %1358 = vmatpush.msra.mxu0 0.0
        %1359 = vmatpush.msra.mxu0 0.0
        %1360 = vmatpush.msra.mxu0 0.0
        %1361 = vmatpush.msra.mxu0 0.0
        %1362 = vmatpush.msra.mxu0 0.0
        %1363 = vmatpush.msra.mxu0 %v1343
        %1364 = vmatpush.msra.mxu0 %v1342
        %1365 = vmatpush.msra.mxu0 %v1341
        %1366 = vmatpush.msra.mxu0 %v1340
        %1367 = vmatmul.f32.gmra.mxu0 %v1349
        %v1368 = vpop.f32.mrf.mxu0
        %v1369 = vadd.f32 %v1346, %v1368
        %1370 = vdwg.mxu0
        %v1371 = vld [vmem:[%s822] sm:$0xff]
        %v1373 = vsel %vm956, %v1338, 0
        %v1376 = vsel %vm956, %v1369, 0
        %1378 = vmatpush.xpose.msra.mxu0 0.0
        %1379 = vmatpush.xpose.msra.mxu0 0.0
        %1380 = vmatpush.xpose.msra.mxu0 0.0
        %1381 = vmatpush.xpose.msra.mxu0 0.0
        %1382 = vmatpush.xpose.msra.mxu0 0.0
        %1383 = vmatpush.xpose.msra.mxu0 0.0
        %1384 = vmatpush.xpose.msra.mxu0 0.0
        %1385 = vmatpush.xpose.msra.mxu0 0.0
        %1386 = vmatpush.xpose.msra.mxu0 0.0
        %1387 = vmatpush.xpose.msra.mxu0 0.0
        %1388 = vmatpush.xpose.msra.mxu0 0.0
        %1389 = vmatpush.xpose.msra.mxu0 0.0
        %1390 = vmatpush.xpose.msra.mxu0 0.0
        %1391 = vmatpush.xpose.msra.mxu0 0.0
        %1392 = vmatpush.xpose.msra.mxu0 0.0
        %1393 = vmatpush.xpose.msra.mxu0 %v1376
        %1394 = vmatmul.f32.gmra.mxu0 %v1373
        %v1395 = vpop.f32.mrf.mxu0
        %v1396 = vadd.f32 0.0, %v1395
        %1397 = vdwg.mxu0
        %v1398 = vmul.f32 %v1396, 0.35355338
        %v1399 = vadd.f32 %v1398, %v1371
        %v1400 = vsel %vm956, %v1399, -inf
        %1401 = vmax.xlane.f32.xlu0 %v1400
        %v1402 = vpop.xlane.xlu0 %1401
        %v1403 = vsub.f32 %v1399, %v1402
        %v1404 = vmul.f32 %v1403, 1.442695
        %v1405 = vpow.pop %v1404
        %v1406 = vsel %vm956, %v1405, 0.0
        %1407 = vadd.xlane.f32.xlu0 %v1406
        %v1408 = vpop.xlane.xlu0 %1407
        %v1409 = vrcp.pop %v1408
        %v1410 = vmul.f32 %v1405, %v1409
        %1411 = vrot.lane.b32.xlu0 %v1369, 96
        %v1412 = vpop.permute.xlu0 %1411
        %v1415 = vsel %vm956, %v1410, 0
        %1417 = vmatpush.msra.mxu0 0.0
        %1418 = vmatpush.msra.mxu0 0.0
        %1419 = vmatpush.msra.mxu0 0.0
        %1420 = vmatpush.msra.mxu0 0.0
        %1421 = vmatpush.msra.mxu0 0.0
        %1422 = vmatpush.msra.mxu0 0.0
        %1423 = vmatpush.msra.mxu0 0.0
        %1424 = vmatpush.msra.mxu0 0.0
        %1425 = vmatpush.msra.mxu0 0.0
        %1426 = vmatpush.msra.mxu0 0.0
        %1427 = vmatpush.msra.mxu0 0.0
        %1428 = vmatpush.msra.mxu0 0.0
        %1429 = vmatpush.msra.mxu0 0.0
        %1430 = vmatpush.msra.mxu0 0.0
        %1431 = vmatpush.msra.mxu0 0.0
        %1432 = vmatpush.msra.mxu0 %v1412
        %1433 = vmatmul.f32.gmra.mxu0 %v1415
        %v1434 = vpop.f32.mrf.mxu0
        %v1435 = vadd.f32 0.0, %v1434
        %1436 = vdwg.mxu0
        %1437 = vrot.lane.b32.xlu0 %v1338, 120
        %v1438 = vpop.permute.xlu0 %1437
        %1439 = vrot.lane.b32.xlu0 %v1369, 120
        %v1440 = vpop.permute.xlu0 %1439
        %v1441 = vsel %vm956, %v1438, 0
        %v1443 = vsel %vm956, %v1440, 0
        %1445 = vmatpush.xpose.msra.mxu0 0.0
        %1446 = vmatpush.xpose.msra.mxu0 0.0
        %1447 = vmatpush.xpose.msra.mxu0 0.0
        %1448 = vmatpush.xpose.msra.mxu0 0.0
        %1449 = vmatpush.xpose.msra.mxu0 0.0
        %1450 = vmatpush.xpose.msra.mxu0 0.0
        %1451 = vmatpush.xpose.msra.mxu0 0.0
        %1452 = vmatpush.xpose.msra.mxu0 0.0
        %1453 = vmatpush.xpose.msra.mxu0 0.0
        %1454 = vmatpush.xpose.msra.mxu0 0.0
        %1455 = vmatpush.xpose.msra.mxu0 0.0
        %1456 = vmatpush.xpose.msra.mxu0 0.0
        %1457 = vmatpush.xpose.msra.mxu0 0.0
        %1458 = vmatpush.xpose.msra.mxu0 0.0
        %1459 = vmatpush.xpose.msra.mxu0 0.0
        %1460 = vmatpush.xpose.msra.mxu0 %v1443
        %1461 = vmatmul.f32.gmra.mxu0 %v1441
        %v1462 = vpop.f32.mrf.mxu0
        %v1463 = vadd.f32 0.0, %v1462
        %1464 = vdwg.mxu0
        %v1465 = vmul.f32 %v1463, 0.35355338
        %v1466 = vadd.f32 %v1465, %v1371
        %v1467 = vsel %vm956, %v1466, -inf
        %1468 = vmax.xlane.f32.xlu0 %v1467
        %v1469 = vpop.xlane.xlu0 %1468
        %v1470 = vsub.f32 %v1466, %v1469
        %v1471 = vmul.f32 %v1470, 1.442695
        %v1472 = vpow.pop %v1471
        %v1473 = vsel %vm956, %v1472, 0.0
        %1474 = vadd.xlane.f32.xlu0 %v1473
        %v1475 = vpop.xlane.xlu0 %1474
        %v1476 = vrcp.pop %v1475
        %v1477 = vmul.f32 %v1472, %v1476
        %1478 = vrot.lane.b32.xlu0 %v1369, 88
        %v1479 = vpop.permute.xlu0 %1478
        %v1482 = vsel %vm956, %v1477, 0
        %1484 = vmatpush.msra.mxu0 0.0
        %1485 = vmatpush.msra.mxu0 0.0
        %1486 = vmatpush.msra.mxu0 0.0
        %1487 = vmatpush.msra.mxu0 0.0
        %1488 = vmatpush.msra.mxu0 0.0
        %1489 = vmatpush.msra.mxu0 0.0
        %1490 = vmatpush.msra.mxu0 0.0
        %1491 = vmatpush.msra.mxu0 0.0
        %1492 = vmatpush.msra.mxu0 0.0
        %1493 = vmatpush.msra.mxu0 0.0
        %1494 = vmatpush.msra.mxu0 0.0
        %1495 = vmatpush.msra.mxu0 0.0
        %1496 = vmatpush.msra.mxu0 0.0
        %1497 = vmatpush.msra.mxu0 0.0
        %1498 = vmatpush.msra.mxu0 0.0
        %1499 = vmatpush.msra.mxu0 %v1479
        %1500 = vmatmul.f32.gmra.mxu0 %v1482
        %v1501 = vpop.f32.mrf.mxu0
        %v1502 = vadd.f32 0.0, %v1501
        %1503 = vdwg.mxu0
        %1504 = vrot.lane.b32.xlu0 %v1338, 112
        %v1505 = vpop.permute.xlu0 %1504
        %1506 = vrot.lane.b32.xlu0 %v1369, 112
        %v1507 = vpop.permute.xlu0 %1506
        %v1508 = vsel %vm956, %v1505, 0
        %v1510 = vsel %vm956, %v1507, 0
        %1512 = vmatpush.xpose.msra.mxu0 0.0
        %1513 = vmatpush.xpose.msra.mxu0 0.0
        %1514 = vmatpush.xpose.msra.mxu0 0.0
        %1515 = vmatpush.xpose.msra.mxu0 0.0
        %1516 = vmatpush.xpose.msra.mxu0 0.0
        %1517 = vmatpush.xpose.msra.mxu0 0.0
        %1518 = vmatpush.xpose.msra.mxu0 0.0
        %1519 = vmatpush.xpose.msra.mxu0 0.0
        %1520 = vmatpush.xpose.msra.mxu0 0.0
        %1521 = vmatpush.xpose.msra.mxu0 0.0
        %1522 = vmatpush.xpose.msra.mxu0 0.0
        %1523 = vmatpush.xpose.msra.mxu0 0.0
        %1524 = vmatpush.xpose.msra.mxu0 0.0
        %1525 = vmatpush.xpose.msra.mxu0 0.0
        %1526 = vmatpush.xpose.msra.mxu0 0.0
        %1527 = vmatpush.xpose.msra.mxu0 %v1510
        %1528 = vmatmul.f32.gmra.mxu0 %v1508
        %v1529 = vpop.f32.mrf.mxu0
        %v1530 = vadd.f32 0.0, %v1529
        %1531 = vdwg.mxu0
        %v1532 = vmul.f32 %v1530, 0.35355338
        %v1533 = vadd.f32 %v1532, %v1371
        %v1534 = vsel %vm956, %v1533, -inf
        %1535 = vmax.xlane.f32.xlu0 %v1534
        %v1536 = vpop.xlane.xlu0 %1535
        %v1537 = vsub.f32 %v1533, %v1536
        %v1538 = vmul.f32 %v1537, 1.442695
        %v1539 = vpow.pop %v1538
        %v1540 = vsel %vm956, %v1539, 0.0
        %1541 = vadd.xlane.f32.xlu0 %v1540
        %v1542 = vpop.xlane.xlu0 %1541
        %v1543 = vrcp.pop %v1542
        %v1544 = vmul.f32 %v1539, %v1543
        %1545 = vrot.lane.b32.xlu0 %v1369, 80
        %v1546 = vpop.permute.xlu0 %1545
        %v1549 = vsel %vm956, %v1544, 0
        %1551 = vmatpush.msra.mxu0 0.0
        %1552 = vmatpush.msra.mxu0 0.0
        %1553 = vmatpush.msra.mxu0 0.0
        %1554 = vmatpush.msra.mxu0 0.0
        %1555 = vmatpush.msra.mxu0 0.0
        %1556 = vmatpush.msra.mxu0 0.0
        %1557 = vmatpush.msra.mxu0 0.0
        %1558 = vmatpush.msra.mxu0 0.0
        %1559 = vmatpush.msra.mxu0 0.0
        %1560 = vmatpush.msra.mxu0 0.0
        %1561 = vmatpush.msra.mxu0 0.0
        %1562 = vmatpush.msra.mxu0 0.0
        %1563 = vmatpush.msra.mxu0 0.0
        %1564 = vmatpush.msra.mxu0 0.0
        %1565 = vmatpush.msra.mxu0 0.0
        %1566 = vmatpush.msra.mxu0 %v1546
        %1567 = vmatmul.f32.gmra.mxu0 %v1549
        %v1568 = vpop.f32.mrf.mxu0
        %v1569 = vadd.f32 0.0, %v1568
        %1570 = vdwg.mxu0
        %1571 = vrot.lane.b32.xlu0 %v1338, 104
        %v1572 = vpop.permute.xlu0 %1571
        %1573 = vrot.lane.b32.xlu0 %v1369, 104
        %v1574 = vpop.permute.xlu0 %1573
        %v1575 = vsel %vm956, %v1572, 0
        %v1577 = vsel %vm956, %v1574, 0
        %1579 = vmatpush.xpose.msra.mxu0 0.0
        %1580 = vmatpush.xpose.msra.mxu0 0.0
        %1581 = vmatpush.xpose.msra.mxu0 0.0
        %1582 = vmatpush.xpose.msra.mxu0 0.0
        %1583 = vmatpush.xpose.msra.mxu0 0.0
        %1584 = vmatpush.xpose.msra.mxu0 0.0
        %1585 = vmatpush.xpose.msra.mxu0 0.0
        %1586 = vmatpush.xpose.msra.mxu0 0.0
        %1587 = vmatpush.xpose.msra.mxu0 0.0
        %1588 = vmatpush.xpose.msra.mxu0 0.0
        %1589 = vmatpush.xpose.msra.mxu0 0.0
        %1590 = vmatpush.xpose.msra.mxu0 0.0
        %1591 = vmatpush.xpose.msra.mxu0 0.0
        %1592 = vmatpush.xpose.msra.mxu0 0.0
        %1593 = vmatpush.xpose.msra.mxu0 0.0
        %1594 = vmatpush.xpose.msra.mxu0 %v1577
        %1595 = vmatmul.f32.gmra.mxu0 %v1575
        %v1596 = vpop.f32.mrf.mxu0
        %v1597 = vadd.f32 0.0, %v1596
        %1598 = vdwg.mxu0
        %v1599 = vmul.f32 %v1597, 0.35355338
        %v1600 = vadd.f32 %v1599, %v1371
        %v1601 = vsel %vm956, %v1600, -inf
        %1602 = vmax.xlane.f32.xlu0 %v1601
        %v1603 = vpop.xlane.xlu0 %1602
        %v1604 = vsub.f32 %v1600, %v1603
        %v1605 = vmul.f32 %v1604, 1.442695
        %v1606 = vpow.pop %v1605
        %v1607 = vsel %vm956, %v1606, 0.0
        %1608 = vadd.xlane.f32.xlu0 %v1607
        %v1609 = vpop.xlane.xlu0 %1608
        %v1610 = vrcp.pop %v1609
        %v1611 = vmul.f32 %v1606, %v1610
        %1612 = vrot.lane.b32.xlu0 %v1369, 72
        %v1613 = vpop.permute.xlu0 %1612
        %v1616 = vsel %vm956, %v1611, 0
        %1618 = vmatpush.msra.mxu0 0.0
        %1619 = vmatpush.msra.mxu0 0.0
        %1620 = vmatpush.msra.mxu0 0.0
        %1621 = vmatpush.msra.mxu0 0.0
        %1622 = vmatpush.msra.mxu0 0.0
        %1623 = vmatpush.msra.mxu0 0.0
        %1624 = vmatpush.msra.mxu0 0.0
        %1625 = vmatpush.msra.mxu0 0.0
        %1626 = vmatpush.msra.mxu0 0.0
        %1627 = vmatpush.msra.mxu0 0.0
        %1628 = vmatpush.msra.mxu0 0.0
        %1629 = vmatpush.msra.mxu0 0.0
        %1630 = vmatpush.msra.mxu0 0.0
        %1631 = vmatpush.msra.mxu0 0.0
        %1632 = vmatpush.msra.mxu0 0.0
        %1633 = vmatpush.msra.mxu0 %v1613
        %1634 = vmatmul.f32.gmra.mxu0 %v1616
        %v1635 = vpop.f32.mrf.mxu0
        %v1636 = vadd.f32 0.0, %v1635
        %1637 = vdwg.mxu0
        %1639 = vrot.lane.b32.xlu0 %v1502, 8
        %v1640 = vpop.permute.xlu0 %1639
        %1643 = vrot.lane.b32.xlu0 %v1569, 16
        %v1644 = vpop.permute.xlu0 %1643
        %1647 = vrot.lane.b32.xlu0 %v1636, 24
        %v1648 = vpop.permute.xlu0 %1647
        %v1650 = vsel %vm956, %v1435, %v1640
        %v1651 = vsel %vm1234, %v1650, %v1644
        %v1652 = vsel %vm1236, %v1651, %v1648
        %v1653 = vld [vmem:[#allocation11] sm:$0xff]
        %v1654 = vld [vmem:[#allocation11 + $0x8] sm:$0xff]
        %v1655 = vld [vmem:[#allocation11 + $0x10] sm:$0xff]
        %v1656 = vld [vmem:[#allocation11 + $0x18] sm:$0xff]
        %v1657 = vld [vmem:[%s15] sm:$0x1]
        %v1659 = vperm.slane %v1657, 0
        %v1662 = vsel %vm928, %v1652, 0
        %1664 = vmatpush.msra.mxu0 0.0
        %1665 = vmatpush.msra.mxu0 0.0
        %1666 = vmatpush.msra.mxu0 0.0
        %1667 = vmatpush.msra.mxu0 0.0
        %1668 = vmatpush.msra.mxu0 0.0
        %1669 = vmatpush.msra.mxu0 0.0
        %1670 = vmatpush.msra.mxu0 0.0
        %1671 = vmatpush.msra.mxu0 0.0
        %1672 = vmatpush.msra.mxu0 0.0
        %1673 = vmatpush.msra.mxu0 0.0
        %1674 = vmatpush.msra.mxu0 0.0
        %1675 = vmatpush.msra.mxu0 0.0
        %1676 = vmatpush.msra.mxu0 %v1656
        %1677 = vmatpush.msra.mxu0 %v1655
        %1678 = vmatpush.msra.mxu0 %v1654
        %1679 = vmatpush.msra.mxu0 %v1653
        %1680 = vmatmul.f32.gmra.mxu0 %v1662
        %v1681 = vpop.f32.mrf.mxu0
        %v1682 = vadd.f32 %v1659, %v1681
        %1683 = vdwg.mxu0
        %v1684 = vadd.f32 %v1308, %v1682
        %v1685 = vld [vmem:[%s16] sm:$0x1]
        %v1686 = vld [vmem:[%s17] sm:$0x1]
        %v1687 = vsel %vm928, %v1684, 0.0
        %1688 = vadd.xlane.f32.xlu0 %v1687
        %v1689 = vpop.xlane.xlu0 %1688
        %v1690 = vmul.f32 %v1689, %v1281
        %v1691 = vsub.f32 %v1684, %v1690
        %v1692 = vmul.f32 %v1691, %v1691
        %v1693 = vsel %vm928, %v1692, 0.0
        %1694 = vadd.xlane.f32.xlu0 %v1693
        %v1695 = vpop.xlane.xlu0 %1694
        %v1696 = vmul.f32 %v1695, %v1281
        %v1697 = vadd.f32 %v1696, 1e-05
        %v1698 = vrsqrt.pop %v1697
        %v1699 = vmul.f32 %v1698, %v1697
        %v1700 = vmul.f32 %v1699, %v1698
        %v1701 = vmul.f32 0.5, %v1700
        %v1702 = vsub.f32 1.5, %v1701
        %v1703 = vmul.f32 %v1698, %v1702
        %vm1704 = vweird.f32 %v1697
        %vm1705 = vweird.f32 %v1698
        %vm1706 = vmor %vm1704, %vm1705
        %v1707 = vsel %vm1706, %v1698, %v1703
        %v1708 = vmul.f32 %v1691, %v1707
        %v1710 = vperm.slane %v1685, 0
        %v1712 = vmul.f32 %v1708, %v1710
        %v1714 = vperm.slane %v1686, 0
        %v1716 = vadd.f32 %v1712, %v1714
        %v1717 = vld [vmem:[#allocation13] sm:$0xff]
        %v1718 = vld [vmem:[#allocation13 + $0x8] sm:$0xff]
        %v1719 = vld [vmem:[#allocation13 + $0x10] sm:$0xff]
        %v1720 = vld [vmem:[#allocation13 + $0x18] sm:$0xff]
        %v1721 = vld [vmem:[%s19] sm:$0x1]
        %v1723 = vperm.slane %v1721, 0
        %v1726 = vsel %vm928, %v1716, 0
        %1728 = vmatpush.msra.mxu0 0.0
        %1729 = vmatpush.msra.mxu0 0.0
        %1730 = vmatpush.msra.mxu0 0.0
        %1731 = vmatpush.msra.mxu0 0.0
        %1732 = vmatpush.msra.mxu0 0.0
        %1733 = vmatpush.msra.mxu0 0.0
        %1734 = vmatpush.msra.mxu0 0.0
        %1735 = vmatpush.msra.mxu0 0.0
        %1736 = vmatpush.msra.mxu0 0.0
        %1737 = vmatpush.msra.mxu0 0.0
        %1738 = vmatpush.msra.mxu0 0.0
        %1739 = vmatpush.msra.mxu0 0.0
        %1740 = vmatpush.msra.mxu0 %v1720
        %1741 = vmatpush.msra.mxu0 %v1719
        %1742 = vmatpush.msra.mxu0 %v1718
        %1743 = vmatpush.msra.mxu0 %v1717
        %1744 = vmatmul.f32.gmra.mxu0 %v1726
        %v1745 = vpop.f32.mrf.mxu0
        %v1746 = vadd.f32 %v1723, %v1745
        %1747 = vdwg.mxu0
        %v1748 = vmax.f32 %v1746, 0.0
        %v1749 = vld [vmem:[%s20] sm:$0xff]
        %v1750 = vld [vmem:[%s20 + $0x8] sm:$0xff]
        %v1751 = vld [vmem:[%s20 + $0x10] sm:$0xff]
        %v1752 = vld [vmem:[%s20 + $0x18] sm:$0xff]
        %v1753 = vld [vmem:[%s20 + $0x20] sm:$0xff]
        %v1754 = vld [vmem:[%s20 + $0x28] sm:$0xff]
        %v1755 = vld [vmem:[%s20 + $0x30] sm:$0xff]
        %v1756 = vld [vmem:[%s20 + $0x38] sm:$0xff]
        %v1757 = vld [vmem:[%s21] sm:$0x1]
        %v1759 = vperm.slane %v1757, 0
        %vm1761 = vcmask 523264
        %v1763 = vsel %vm1761, %v1748, 0
        %1765 = vmatpush.msra.mxu0 0.0
        %1766 = vmatpush.msra.mxu0 0.0
        %1767 = vmatpush.msra.mxu0 0.0
        %1768 = vmatpush.msra.mxu0 0.0
        %1769 = vmatpush.msra.mxu0 0.0
        %1770 = vmatpush.msra.mxu0 0.0
        %1771 = vmatpush.msra.mxu0 0.0
        %1772 = vmatpush.msra.mxu0 0.0
        %1773 = vmatpush.msra.mxu0 %v1756
        %1774 = vmatpush.msra.mxu0 %v1755
        %1775 = vmatpush.msra.mxu0 %v1754
        %1776 = vmatpush.msra.mxu0 %v1753
        %1777 = vmatpush.msra.mxu0 %v1752
        %1778 = vmatpush.msra.mxu0 %v1751
        %1779 = vmatpush.msra.mxu0 %v1750
        %1780 = vmatpush.msra.mxu0 %v1749
        %1781 = vmatmul.f32.gmra.mxu0 %v1763
        %v1782 = vpop.f32.mrf.mxu0
        %v1783 = vadd.f32 %v1759, %v1782
        %1784 = vdwg.mxu0
        %v1785 = vadd.f32 %v1716, %v1783
        %v1786 = vld [vmem:[%s22] sm:$0x1]
        %v1787 = vld [vmem:[%s23] sm:$0x1]
        %v1788 = vsel %vm928, %v1785, 0.0
        %1789 = vadd.xlane.f32.xlu0 %v1788
        %v1790 = vpop.xlane.xlu0 %1789
        %v1791 = vmul.f32 %v1790, %v1281
        %v1792 = vsub.f32 %v1785, %v1791
        %v1793 = vmul.f32 %v1792, %v1792
        %v1794 = vsel %vm928, %v1793, 0.0
        %1795 = vadd.xlane.f32.xlu0 %v1794
        %v1796 = vpop.xlane.xlu0 %1795
        %v1797 = vmul.f32 %v1796, %v1281
        %v1798 = vadd.f32 %v1797, 1e-05
        %v1799 = vrsqrt.pop %v1798
        %v1800 = vmul.f32 %v1799, %v1798
        %v1801 = vmul.f32 %v1800, %v1799
        %v1802 = vmul.f32 0.5, %v1801
        %v1803 = vsub.f32 1.5, %v1802
        %v1804 = vmul.f32 %v1799, %v1803
        %vm1805 = vweird.f32 %v1798
        %vm1806 = vweird.f32 %v1799
        %vm1807 = vmor %vm1805, %vm1806
        %v1808 = vsel %vm1807, %v1799, %v1804
        %v1809 = vmul.f32 %v1792, %v1808
        %v1811 = vperm.slane %v1786, 0
        %v1813 = vmul.f32 %v1809, %v1811
        %v1815 = vperm.slane %v1787, 0
        %v1817 = vadd.f32 %v1813, %v1815
        %1818 = vst.msk [vmem:[%s917] sm:$0xff] %vm928, %v1817
        %s1819 = sand.u32 %s580, 1
        %s1820 = scalar_lea.sflag [#allocation4], %s1819
        %s1821 = sand.u32 %s580, 1
        %s1822 = smul.addr %s1821, 8
        %s1823 = scalar_lea.vmem [#allocation14], %s1822
        // Predicated region
        $region145: #{tpu_custom_call.1} parent=115 // pred_check
          %p1824 = pneg %p590
        $region146: #{tpu_custom_call.1} parent=115 // pred_check_branch
          %1826 = sbr.rel (%p1824) target = $region148
        $region147: #{tpu_custom_call.1} parent=115 // pred_region
          %1828 = vsyncadd %s1820, 0
          %s1829 = smul.addr %s48, 8
          %s1830 = scalar_lea.hbm %s24, %s1829
          %s1832 = sshll.u32 %s1823, 4
          %s1833 = int_to_ptr.vmem [resolvable:$true] %s1832
          %s1834 = sshll.u32 %s1830, 4
          %s1835 = int_to_ptr.hbm [resolvable:$true] %s1834
          %1837 = dma.vmem_to_hbm [thread:$0]  %s1833, 128, %s1835, %s1820
        $region148: #{tpu_custom_call.1} parent=115 // pred_fallthru
          _
      $region116: #{tpu_custom_call.1} parent=5 // pred_fallthru
        _
      %p1838 = scmp.le.s32.totalorder 2, %s43
      // Predicated region
      $region149: #{tpu_custom_call.1} parent=5 // pred_check
        %p1839 = pneg %p1838
      $region150: #{tpu_custom_call.1} parent=5 // pred_check_branch
        %1841 = sbr.rel (%p1839) target = $region152
      $region151: #{tpu_custom_call.1} parent=5 // pred_region
        %s1842 = ssub.s32 %s43, 2
        // Predicated region
        $region153: #{tpu_custom_call.1} parent=151 // pred_check
          %p1843 = pneg %p596
        $region154: #{tpu_custom_call.1} parent=151 // pred_check_branch
          %1845 = sbr.rel (%p1843) target = $region156
        $region155: #{tpu_custom_call.1} parent=151 // pred_region
          %s1846 = sand.u32 %s581, 1
          %s1847 = scalar_lea.sflag [#allocation4], %s1846
          %s1848 = sand.u32 %s581, 1
          %s1849 = smul.addr %s1848, 8
          %s1850 = scalar_lea.vmem [#allocation14], %s1849
          %1852 = dma.done %s1847, 128
        $region156: #{tpu_custom_call.1} parent=151 // pred_fallthru
          _
      $region152: #{tpu_custom_call.1} parent=5 // pred_fallthru
        _
    $region6: #{tpu_custom_call.1} parent=1 // loop_footer
      %s47 = sadd.s32 1, %s43
    $region7: #{tpu_custom_call.1} parent=1 // loop_footer_branch
      %42 = sbr.rel target = $region3
    $region8: #{tpu_custom_call.1} parent=1 // loop_exit
      _
    %1853 = vsyncpa [#allocation3], 1
    %s1854 = scalar_lea.sflag [#allocation3], 1
    %1855 = vsyncpa %s1854, 1
    %1856 = vsyncpa [#allocation6], 1
    %s1857 = scalar_lea.sflag [#allocation6], 1
    %1858 = vsyncpa %s1857, 1
    %1859 = vsyncpa [#allocation9], 1
    %s1860 = scalar_lea.sflag [#allocation9], 1
    %1861 = vsyncpa %s1860, 1
    %1862 = vsyncpa [#allocation12], 1
    %1863 = vsyncpa [#allocation4], 1
    %s1864 = scalar_lea.sflag [#allocation4], 1
    %1865 = vsyncpa %s1864, 1

</llo_original>
